<compile_context>
chip_gen: v7x
topology: tpu7x:2x2x1
jax: 0.10.0
libtpu: 0.0.40
codegen_flags: <defaults>
</compile_context>

<pallas_src>
import math
import jax
import jax.numpy as jnp
from jax.experimental import pallas as pl
from jax.experimental.pallas import tpu as pltpu


OUT_PAD = 128   # fused head output dim padded to one full lane register


# ----------------------------------------------------------------------------
# Fused kernel: one encoder layer + both task heads.
# Grid = (B, S // TILE_S); weights resident, activations streamed per q-tile.
# ----------------------------------------------------------------------------
def encoder_heads_kernel(x_ref, maskb_ref,
                         wq_ref, bq_ref, wk_ref, bk_ref, wv_ref, bv_ref,
                         wo_ref, bo_ref, ln1g_ref, ln1b_ref,
                         w1_ref, c1_ref, w2_ref, c2_ref,
                         ln2g_ref, ln2b_ref, wh_ref, bh_ref,
                         hid_ref, logits_ref,
                         k_sc, v_sc):
    q_idx = pl.program_id(1)
    tile_s = hid_ref.shape[1]
    h_dim = hid_ref.shape[2]
    scale = 1.0 / math.sqrt(h_dim)

    # K/V for the whole sequence: computed once per batch element (q_idx == 0),
    # kept in bf16 VMEM scratch and reused by every query tile.
    @pl.when(q_idx == 0)
    def _compute_kv():
        x_all = x_ref[0]                                            # (S, H) bf16
        k = jnp.dot(x_all, wk_ref[...],
                    preferred_element_type=jnp.float32) + bk_ref[...]
        v = jnp.dot(x_all, wv_ref[...],
                    preferred_element_type=jnp.float32) + bv_ref[...]
        k_sc[...] = k.astype(jnp.bfloat16)
        v_sc[...] = v.astype(jnp.bfloat16)

    # Query rows for this tile.
    row0 = pl.multiple_of(q_idx * tile_s, tile_s)
    xq = x_ref[0, pl.ds(row0, tile_s), :]                           # (T, H) bf16

    qh = jnp.dot(xq, wq_ref[...],
                 preferred_element_type=jnp.float32) + bq_ref[...]  # (T, H) f32

    # scores = q @ k^T (contract H with H; no explicit transpose materialized)
    scores = jax.lax.dot_general(
        qh.astype(jnp.bfloat16), k_sc[...],
        (((1,), (1,)), ((), ())),
        preferred_element_type=jnp.float32) * scale                 # (T, S) f32
    scores = scores + maskb_ref[0]                                  # (1,S) bias, precomputed
    scores = scores - jnp.max(scores, axis=-1, keepdims=True)
    p = jnp.exp(scores)
    p = p * pl.reciprocal(jnp.sum(p, axis=-1, keepdims=True), approx=True)

    attn = jnp.dot(p.astype(jnp.bfloat16), v_sc[...],
                   preferred_element_type=jnp.float32)              # (T, H) f32
    attn = jnp.dot(attn.astype(jnp.bfloat16), wo_ref[...],
                   preferred_element_type=jnp.float32) + bo_ref[...]

    def layernorm(z, g_ref, b_ref):                                 # f32 VPU math
        mu = jnp.mean(z, axis=-1, keepdims=True)
        var = jnp.mean(jnp.square(z - mu), axis=-1, keepdims=True)
        return (z - mu) * jax.lax.rsqrt(var + 1e-5) * g_ref[...] + b_ref[...]

    h1 = layernorm(xq.astype(jnp.float32) + attn, ln1g_ref, ln1b_ref)

    ff = jnp.dot(h1.astype(jnp.bfloat16), w1_ref[...],
                 preferred_element_type=jnp.float32) + c1_ref[...]
    ff = jnp.maximum(ff, 0.0)
    ff = jnp.dot(ff.astype(jnp.bfloat16), w2_ref[...],
                 preferred_element_type=jnp.float32) + c2_ref[...]

    h2 = layernorm(h1 + ff, ln2g_ref, ln2b_ref)                     # (T, H) f32
    hid_ref[0] = h2.astype(hid_ref.dtype)

    # Fused classification + sentiment heads on the CLS row, computed in the
    # tile that contains token 0.  8 rows are used to keep the store
    # sublane/lane-dense; the wrapper only consumes row 0.
    @pl.when(q_idx == 0)
    def _heads():
        cls8 = h2[0:8, :].astype(jnp.bfloat16)                      # (8, H)
        logits_ref[0] = jnp.dot(cls8, wh_ref[...],
                                preferred_element_type=jnp.float32) + bh_ref[...]


# ----------------------------------------------------------------------------
# Parameter init / packing
# ----------------------------------------------------------------------------
def init_params(key, vocab, seq, hidden, ffn, num_classes, num_sentiments):
    ks = jax.random.split(key, 16)
    n = lambda k, shp, s=0.02: (s * jax.random.normal(k, shp)).astype(jnp.float32)
    z = lambda shp: jnp.zeros(shp, jnp.float32)
    o = lambda shp: jnp.ones(shp, jnp.float32)
    return {
        'tok_emb': n(ks[0], (vocab, hidden)),
        'pos_emb': n(ks[1], (seq, hidden)),
        'wq': n(ks[2], (hidden, hidden)), 'bq': z((hidden,)),
        'wk': n(ks[3], (hidden, hidden)), 'bk': z((hidden,)),
        'wv': n(ks[4], (hidden, hidden)), 'bv': z((hidden,)),
        'wo': n(ks[5], (hidden, hidden)), 'bo': z((hidden,)),
        'ln1_g': o((hidden,)), 'ln1_b': z((hidden,)),
        'w1': n(ks[6], (hidden, ffn)), 'c1': z((ffn,)),
        'w2': n(ks[7], (ffn, hidden)), 'c2': z((hidden,)),
        'ln2_g': o((hidden,)), 'ln2_b': z((hidden,)),
        'wc': n(ks[8], (hidden, num_classes)), 'bc': z((num_classes,)),
        'ws': n(ks[9], (hidden, num_sentiments)), 'bs': z((num_sentiments,)),
    }


def _prepare_operands(p):
    """bf16 matmul weights, (1, d) row vectors for VPU params, fused+padded heads."""
    H = p['wq'].shape[0]
    nc = p['bc'].shape[0]
    ns = p['bs'].shape[0]
    bf = lambda w: w.astype(jnp.bfloat16)
    row = lambda v: v.reshape(1, -1).astype(jnp.float32)
    wh = (jnp.zeros((H, OUT_PAD), jnp.float32)
          .at[:, :nc].set(p['wc'])
          .at[:, nc:nc + ns].set(p['ws'])).astype(jnp.bfloat16)
    bh = (jnp.zeros((1, OUT_PAD), jnp.float32)
          .at[0, :nc].set(p['bc'])
          .at[0, nc:nc + ns].set(p['bs']))
    return (bf(p['wq']), row(p['bq']), bf(p['wk']), row(p['bk']),
            bf(p['wv']), row(p['bv']), bf(p['wo']), row(p['bo']),
            row(p['ln1_g']), row(p['ln1_b']),
            bf(p['w1']), row(p['c1']), bf(p['w2']), row(p['c2']),
            row(p['ln2_g']), row(p['ln2_b']),
            wh, bh)


# ----------------------------------------------------------------------------
# Forward pass
# ----------------------------------------------------------------------------
def multitask_forward(input_ids, attention_mask, p):
    # Embedding gather is glue in plain JAX (no clean Pallas gather on TPU).
    # TODO(synk): arbitrary HF transformer backbone replaced by one deterministic
    #             single-head encoder layer.
    x = p['tok_emb'][input_ids] + p['pos_emb'][None, :, :]          # (B, S, H) f32
    x = x.astype(jnp.bfloat16)
    B, S, H = x.shape
    F = p['w1'].shape[1]
    nc = p['bc'].shape[0]
    ns = p['bs'].shape[0]

    # Additive attention-mask bias, precomputed once (0 for keep, -1e9 for pad).
    mask_bias = ((attention_mask.astype(jnp.float32) - 1.0) * 1e9).reshape(B, 1, S)

    TILE_S = 64 if S % 64 == 0 else S
    assert S % TILE_S == 0 and TILE_S >= 8

    weight_spec = lambda shp: pl.BlockSpec(shp, lambda b, q: (0,) * len(shp))
    operands = _prepare_operands(p)

    grid_spec = pltpu.PrefetchScalarGridSpec(
        num_scalar_prefetch=0,
        grid=(B, S // TILE_S),
        in_specs=[
            pl.BlockSpec((1, S, H), lambda b, q: (b, 0, 0)),    # x (full seq per batch)
            pl.BlockSpec((1, 1, S), lambda b, q: (b, 0, 0)),    # mask bias
            weight_spec((H, H)), weight_spec((1, H)),           # wq, bq
            weight_spec((H, H)), weight_spec((1, H)),           # wk, bk
            weight_spec((H, H)), weight_spec((1, H)),           # wv, bv
            weight_spec((H, H)), weight_spec((1, H)),           # wo, bo
            weight_spec((1, H)), weight_spec((1, H)),           # ln1 g/b
            weight_spec((H, F)), weight_spec((1, F)),           # w1, c1
            weight_spec((F, H)), weight_spec((1, H)),           # w2, c2
            weight_spec((1, H)), weight_spec((1, H)),           # ln2 g/b
            weight_spec((H, OUT_PAD)), weight_spec((1, OUT_PAD)),  # fused heads
        ],
        out_specs=[
            pl.BlockSpec((1, TILE_S, H), lambda b, q: (b, q, 0)),   # last_hidden_state
            pl.BlockSpec((1, 8, OUT_PAD), lambda b, q: (b, 0, 0)),  # fused head logits
        ],
        scratch_shapes=[
            pltpu.VMEM((S, H), jnp.bfloat16),   # K cache (per batch element)
            pltpu.VMEM((S, H), jnp.bfloat16),   # V cache
        ],
    )

    hidden, logits = pl.pallas_call(
        encoder_heads_kernel,
        out_shape=(jax.ShapeDtypeStruct((B, S, H), jnp.float32),
                   jax.ShapeDtypeStruct((B, 8, OUT_PAD), jnp.float32)),
        grid_spec=grid_spec,
        compiler_params=pltpu.CompilerParams(
            dimension_semantics=("parallel", "arbitrary"),
            vmem_limit_bytes=32 * 1024 * 1024),
    )(x, mask_bias, *operands)

    del hidden  # full last_hidden_state is produced by the backbone but the
                # module only consumes the CLS row (heads already fused in-kernel)

    cls_row = logits[:, 0, :]                     # (B, OUT_PAD); row 0 == CLS token
    classification_output = cls_row[:, :nc]
    sentiment_output = cls_row[:, nc:nc + ns]
    return classification_output, sentiment_output


if __name__ == "__main__":
    B, S, H, F = 2, 128, 128, 256
    VOCAB, NUM_CLASSES, NUM_SENTIMENTS = 1000, 4, 3

    key = jax.random.PRNGKey(0)
    k_ids, k_params = jax.random.split(key)

    params = init_params(k_params, VOCAB, S, H, F, NUM_CLASSES, NUM_SENTIMENTS)

    input_ids = jax.random.randint(k_ids, (B, S), 0, VOCAB, dtype=jnp.int32)
    attention_mask = jnp.ones((B, S), dtype=jnp.int32).at[1, 96:].set(0)

    fwd = jax.jit(multitask_forward)
    cls_logits, sent_logits = fwd(input_ids, attention_mask, params)
    jax.block_until_ready((cls_logits, sent_logits))

    assert cls_logits.shape == (B, NUM_CLASSES)
    assert sent_logits.shape == (B, NUM_SENTIMENTS)
    assert bool(jnp.all(jnp.isfinite(cls_logits)))
    assert bool(jnp.all(jnp.isfinite(sent_logits)))
    print("KERNEL_OK")
</pallas_src>

<mosaic_0001>
module attributes {stable_mosaic.version = 11 : i64} {
  func.func @encoder_heads_kernel(%arg0: i32, %arg1: i32, %arg2: memref<1x128x128xbf16, #tpu.memory_space<vmem>>, %arg3: memref<1x1x128xf32, #tpu.memory_space<vmem>>, %arg4: memref<128x128xbf16, #tpu.memory_space<vmem>>, %arg5: memref<1x128xf32, #tpu.memory_space<vmem>>, %arg6: memref<128x128xbf16, #tpu.memory_space<vmem>>, %arg7: memref<1x128xf32, #tpu.memory_space<vmem>>, %arg8: memref<128x128xbf16, #tpu.memory_space<vmem>>, %arg9: memref<1x128xf32, #tpu.memory_space<vmem>>, %arg10: memref<128x128xbf16, #tpu.memory_space<vmem>>, %arg11: memref<1x128xf32, #tpu.memory_space<vmem>>, %arg12: memref<1x128xf32, #tpu.memory_space<vmem>>, %arg13: memref<1x128xf32, #tpu.memory_space<vmem>>, %arg14: memref<128x256xbf16, #tpu.memory_space<vmem>>, %arg15: memref<1x256xf32, #tpu.memory_space<vmem>>, %arg16: memref<256x128xbf16, #tpu.memory_space<vmem>>, %arg17: memref<1x128xf32, #tpu.memory_space<vmem>>, %arg18: memref<1x128xf32, #tpu.memory_space<vmem>>, %arg19: memref<1x128xf32, #tpu.memory_space<vmem>>, %arg20: memref<128x128xbf16, #tpu.memory_space<vmem>>, %arg21: memref<1x128xf32, #tpu.memory_space<vmem>>, %arg22: memref<1x64x128xf32, #tpu.memory_space<vmem>>, %arg23: memref<1x8x128xf32, #tpu.memory_space<vmem>>, %arg24: memref<128x128xbf16, #tpu.memory_space<vmem>>, %arg25: memref<128x128xbf16, #tpu.memory_space<vmem>>) attributes {dimension_semantics = [#tpu.dimension_semantics<parallel>, #tpu.dimension_semantics<arbitrary>], iteration_bounds = array<i64: 2, 2>, scalar_prefetch = 0 : i64, scratch_operands = 2 : i64, tpu.core_type = #tpu.core_type<tc>, window_params = [{transform_indices = @transform_0, window_bounds = array<i64: 1, 128, 128>}, {transform_indices = @transform_1, window_bounds = array<i64: 1, 1, 128>}, {pipeline_mode = #tpu.pipeline_mode<synchronous>, transform_indices = @transform_2, window_bounds = array<i64: 128, 128>}, {pipeline_mode = #tpu.pipeline_mode<synchronous>, transform_indices = @transform_3, window_bounds = array<i64: 1, 128>}, {pipeline_mode = #tpu.pipeline_mode<synchronous>, transform_indices = @transform_4, window_bounds = array<i64: 128, 128>}, {pipeline_mode = #tpu.pipeline_mode<synchronous>, transform_indices = @transform_5, window_bounds = array<i64: 1, 128>}, {pipeline_mode = #tpu.pipeline_mode<synchronous>, transform_indices = @transform_6, window_bounds = array<i64: 128, 128>}, {pipeline_mode = #tpu.pipeline_mode<synchronous>, transform_indices = @transform_7, window_bounds = array<i64: 1, 128>}, {pipeline_mode = #tpu.pipeline_mode<synchronous>, transform_indices = @transform_8, window_bounds = array<i64: 128, 128>}, {pipeline_mode = #tpu.pipeline_mode<synchronous>, transform_indices = @transform_9, window_bounds = array<i64: 1, 128>}, {pipeline_mode = #tpu.pipeline_mode<synchronous>, transform_indices = @transform_10, window_bounds = array<i64: 1, 128>}, {pipeline_mode = #tpu.pipeline_mode<synchronous>, transform_indices = @transform_11, window_bounds = array<i64: 1, 128>}, {pipeline_mode = #tpu.pipeline_mode<synchronous>, transform_indices = @transform_12, window_bounds = array<i64: 128, 256>}, {pipeline_mode = #tpu.pipeline_mode<synchronous>, transform_indices = @transform_13, window_bounds = array<i64: 1, 256>}, {pipeline_mode = #tpu.pipeline_mode<synchronous>, transform_indices = @transform_14, window_bounds = array<i64: 256, 128>}, {pipeline_mode = #tpu.pipeline_mode<synchronous>, transform_indices = @transform_15, window_bounds = array<i64: 1, 128>}, {pipeline_mode = #tpu.pipeline_mode<synchronous>, transform_indices = @transform_16, window_bounds = array<i64: 1, 128>}, {pipeline_mode = #tpu.pipeline_mode<synchronous>, transform_indices = @transform_17, window_bounds = array<i64: 1, 128>}, {pipeline_mode = #tpu.pipeline_mode<synchronous>, transform_indices = @transform_18, window_bounds = array<i64: 128, 128>}, {pipeline_mode = #tpu.pipeline_mode<synchronous>, transform_indices = @transform_19, window_bounds = array<i64: 1, 128>}, {transform_indices = @transform_20, window_bounds = array<i64: 1, 64, 128>}, {transform_indices = @transform_21, window_bounds = array<i64: 1, 8, 128>}]} {
    %c0_i32 = arith.constant 0 : i32
    %0 = arith.cmpi eq, %arg1, %c0_i32 : i32
    %1 = arith.extui %0 : i1 to i32
    %c0_i32_0 = arith.constant 0 : i32
    %2 = arith.cmpi ne, %1, %c0_i32_0 : i32
    scf.if %2 {
      %c0_57 = arith.constant 0 : index
      %c0_58 = arith.constant 0 : index
      %c0_59 = arith.constant 0 : index
      %112 = vector.load %arg2[%c0_57, %c0_58, %c0_59] : memref<1x128x128xbf16, #tpu.memory_space<vmem>>, vector<1x128x128xbf16>
      %113 = vector.shape_cast %112 : vector<1x128x128xbf16> to vector<128x128xbf16>
      %c0_60 = arith.constant 0 : index
      %c0_61 = arith.constant 0 : index
      %114 = vector.load %arg6[%c0_60, %c0_61] : memref<128x128xbf16, #tpu.memory_space<vmem>>, vector<128x128xbf16>
      %cst_62 = arith.constant dense<0.000000e+00> : vector<128x128xf32>
      %115 = tpu.matmul %113, %114, %cst_62 {dimension_numbers = #tpu.dot_dimension_numbers<[1], [0], [0], [1], [0, 0, 1, 1], [], []>} : vector<128x128xbf16>, vector<128x128xbf16>, vector<128x128xf32> -> vector<128x128xf32>
      %c0_63 = arith.constant 0 : index
      %c0_64 = arith.constant 0 : index
      %116 = vector.load %arg7[%c0_63, %c0_64] : memref<1x128xf32, #tpu.memory_space<vmem>>, vector<1x128xf32>
      %117 = vector.broadcast %116 : vector<1x128xf32> to vector<128x128xf32>
      %118 = arith.addf %115, %117 : vector<128x128xf32>
      %c0_65 = arith.constant 0 : index
      %c0_66 = arith.constant 0 : index
      %119 = vector.load %arg8[%c0_65, %c0_66] : memref<128x128xbf16, #tpu.memory_space<vmem>>, vector<128x128xbf16>
      %cst_67 = arith.constant dense<0.000000e+00> : vector<128x128xf32>
      %120 = tpu.matmul %113, %119, %cst_67 {dimension_numbers = #tpu.dot_dimension_numbers<[1], [0], [0], [1], [0, 0, 1, 1], [], []>} : vector<128x128xbf16>, vector<128x128xbf16>, vector<128x128xf32> -> vector<128x128xf32>
      %c0_68 = arith.constant 0 : index
      %c0_69 = arith.constant 0 : index
      %121 = vector.load %arg9[%c0_68, %c0_69] : memref<1x128xf32, #tpu.memory_space<vmem>>, vector<1x128xf32>
      %122 = vector.broadcast %121 : vector<1x128xf32> to vector<128x128xf32>
      %123 = arith.addf %120, %122 : vector<128x128xf32>
      %124 = arith.truncf %118 : vector<128x128xf32> to vector<128x128xbf16>
      %c0_70 = arith.constant 0 : index
      %c0_71 = arith.constant 0 : index
      %125 = vector.load %arg24[%c0_70, %c0_71] : memref<128x128xbf16, #tpu.memory_space<vmem>>, vector<128x128xbf16>
      tpu.vector_store %arg24[%c0_70, %c0_71], %124 {strides = array<i32>} : memref<128x128xbf16, #tpu.memory_space<vmem>>, vector<128x128xbf16>,
      %126 = arith.truncf %123 : vector<128x128xf32> to vector<128x128xbf16>
      %c0_72 = arith.constant 0 : index
      %c0_73 = arith.constant 0 : index
      %127 = vector.load %arg25[%c0_72, %c0_73] : memref<128x128xbf16, #tpu.memory_space<vmem>>, vector<128x128xbf16>
      tpu.vector_store %arg25[%c0_72, %c0_73], %126 {strides = array<i32>} : memref<128x128xbf16, #tpu.memory_space<vmem>>, vector<128x128xbf16>,
    } else {
    }
    %c64_i32 = arith.constant 64 : i32
    %3 = arith.muli %arg1, %c64_i32 : i32
    %4 = tpu.assume_multiple %3, 64 : i32
    %c0 = arith.constant 0 : index
    %5 = arith.index_cast %4 : i32 to index
    %c0_1 = arith.constant 0 : index
    %6 = vector.load %arg2[%c0, %5, %c0_1] : memref<1x128x128xbf16, #tpu.memory_space<vmem>>, vector<1x64x128xbf16>
    %7 = vector.shape_cast %6 : vector<1x64x128xbf16> to vector<64x128xbf16>
    %c0_2 = arith.constant 0 : index
    %c0_3 = arith.constant 0 : index
    %8 = vector.load %arg4[%c0_2, %c0_3] : memref<128x128xbf16, #tpu.memory_space<vmem>>, vector<128x128xbf16>
    %cst = arith.constant dense<0.000000e+00> : vector<64x128xf32>
    %9 = tpu.matmul %7, %8, %cst {dimension_numbers = #tpu.dot_dimension_numbers<[1], [0], [0], [1], [0, 0, 1, 1], [], []>} : vector<64x128xbf16>, vector<128x128xbf16>, vector<64x128xf32> -> vector<64x128xf32>
    %c0_4 = arith.constant 0 : index
    %c0_5 = arith.constant 0 : index
    %10 = vector.load %arg5[%c0_4, %c0_5] : memref<1x128xf32, #tpu.memory_space<vmem>>, vector<1x128xf32>
    %11 = vector.broadcast %10 : vector<1x128xf32> to vector<64x128xf32>
    %12 = arith.addf %9, %11 : vector<64x128xf32>
    %13 = arith.truncf %12 : vector<64x128xf32> to vector<64x128xbf16>
    %c0_6 = arith.constant 0 : index
    %c0_7 = arith.constant 0 : index
    %14 = vector.load %arg24[%c0_6, %c0_7] : memref<128x128xbf16, #tpu.memory_space<vmem>>, vector<128x128xbf16>
    %cst_8 = arith.constant dense<0.000000e+00> : vector<64x128xf32>
    %15 = tpu.matmul %13, %14, %cst_8 {dimension_numbers = #tpu.dot_dimension_numbers<[1], [1], [0], [0], [0, 0, 1, 0], [], []>} : vector<64x128xbf16>, vector<128x128xbf16>, vector<64x128xf32> -> vector<64x128xf32>
    %cst_9 = arith.constant 0.0883883461 : f32
    %16 = vector.broadcast %cst_9 : f32 to vector<64x128xf32>
    %17 = arith.mulf %15, %16 : vector<64x128xf32>
    %c0_10 = arith.constant 0 : index
    %c0_11 = arith.constant 0 : index
    %c0_12 = arith.constant 0 : index
    %18 = vector.load %arg3[%c0_10, %c0_11, %c0_12] : memref<1x1x128xf32, #tpu.memory_space<vmem>>, vector<1x1x128xf32>
    %19 = vector.shape_cast %18 : vector<1x1x128xf32> to vector<1x128xf32>
    %20 = vector.broadcast %19 : vector<1x128xf32> to vector<64x128xf32>
    %21 = arith.addf %17, %20 : vector<64x128xf32>
    %cst_13 = arith.constant dense<0xFF800000> : vector<64xf32>
    %22 = vector.multi_reduction <maximumf>, %21, %cst_13 [1] : vector<64x128xf32> to vector<64xf32>
    %23 = vector.shape_cast %22 : vector<64xf32> to vector<64x1xf32>
    %24 = vector.broadcast %23 : vector<64x1xf32> to vector<64x128xf32>
    %25 = arith.subf %21, %24 : vector<64x128xf32>
    %26 = math.exp %25 : vector<64x128xf32>
    %cst_14 = arith.constant dense<0.000000e+00> : vector<64xf32>
    %27 = vector.multi_reduction <add>, %26, %cst_14 [1] : vector<64x128xf32> to vector<64xf32>
    %28 = vector.shape_cast %27 : vector<64xf32> to vector<64x1xf32>
    %29 = tpu.reciprocal %28 {approx = true} : vector<64x1xf32> -> vector<64x1xf32>
    %30 = vector.broadcast %29 : vector<64x1xf32> to vector<64x128xf32>
    %31 = arith.mulf %26, %30 : vector<64x128xf32>
    %32 = arith.truncf %31 : vector<64x128xf32> to vector<64x128xbf16>
    %c0_15 = arith.constant 0 : index
    %c0_16 = arith.constant 0 : index
    %33 = vector.load %arg25[%c0_15, %c0_16] : memref<128x128xbf16, #tpu.memory_space<vmem>>, vector<128x128xbf16>
    %cst_17 = arith.constant dense<0.000000e+00> : vector<64x128xf32>
    %34 = tpu.matmul %32, %33, %cst_17 {dimension_numbers = #tpu.dot_dimension_numbers<[1], [0], [0], [1], [0, 0, 1, 1], [], []>} : vector<64x128xbf16>, vector<128x128xbf16>, vector<64x128xf32> -> vector<64x128xf32>
    %35 = arith.truncf %34 : vector<64x128xf32> to vector<64x128xbf16>
    %c0_18 = arith.constant 0 : index
    %c0_19 = arith.constant 0 : index
    %36 = vector.load %arg10[%c0_18, %c0_19] : memref<128x128xbf16, #tpu.memory_space<vmem>>, vector<128x128xbf16>
    %cst_20 = arith.constant dense<0.000000e+00> : vector<64x128xf32>
    %37 = tpu.matmul %35, %36, %cst_20 {dimension_numbers = #tpu.dot_dimension_numbers<[1], [0], [0], [1], [0, 0, 1, 1], [], []>} : vector<64x128xbf16>, vector<128x128xbf16>, vector<64x128xf32> -> vector<64x128xf32>
    %c0_21 = arith.constant 0 : index
    %c0_22 = arith.constant 0 : index
    %38 = vector.load %arg11[%c0_21, %c0_22] : memref<1x128xf32, #tpu.memory_space<vmem>>, vector<1x128xf32>
    %39 = vector.broadcast %38 : vector<1x128xf32> to vector<64x128xf32>
    %40 = arith.addf %37, %39 : vector<64x128xf32>
    %41 = arith.extf %7 : vector<64x128xbf16> to vector<64x128xf32>
    %42 = arith.addf %41, %40 : vector<64x128xf32>
    %cst_23 = arith.constant dense<0.000000e+00> : vector<64xf32>
    %43 = vector.multi_reduction <add>, %42, %cst_23 [1] : vector<64x128xf32> to vector<64xf32>
    %44 = vector.shape_cast %43 : vector<64xf32> to vector<64x1xf32>
    %cst_24 = arith.constant 1.280000e+02 : f32
    %45 = vector.broadcast %cst_24 : f32 to vector<64x1xf32>
    %46 = arith.divf %44, %45 : vector<64x1xf32>
    %47 = vector.broadcast %46 : vector<64x1xf32> to vector<64x128xf32>
    %48 = arith.subf %42, %47 : vector<64x128xf32>
    %49 = arith.mulf %48, %48 : vector<64x128xf32>
    %cst_25 = arith.constant dense<0.000000e+00> : vector<64xf32>
    %50 = vector.multi_reduction <add>, %49, %cst_25 [1] : vector<64x128xf32> to vector<64xf32>
    %51 = vector.shape_cast %50 : vector<64xf32> to vector<64x1xf32>
    %cst_26 = arith.constant 1.280000e+02 : f32
    %52 = vector.broadcast %cst_26 : f32 to vector<64x1xf32>
    %53 = arith.divf %51, %52 : vector<64x1xf32>
    %54 = vector.broadcast %46 : vector<64x1xf32> to vector<64x128xf32>
    %55 = arith.subf %42, %54 : vector<64x128xf32>
    %cst_27 = arith.constant 9.99999974E-6 : f32
    %56 = vector.broadcast %cst_27 : f32 to vector<64x1xf32>
    %57 = arith.addf %53, %56 : vector<64x1xf32>
    %58 = math.rsqrt %57 : vector<64x1xf32>
    %59 = vector.broadcast %58 : vector<64x1xf32> to vector<64x128xf32>
    %60 = arith.mulf %55, %59 : vector<64x128xf32>
    %c0_28 = arith.constant 0 : index
    %c0_29 = arith.constant 0 : index
    %61 = vector.load %arg12[%c0_28, %c0_29] : memref<1x128xf32, #tpu.memory_space<vmem>>, vector<1x128xf32>
    %62 = vector.broadcast %61 : vector<1x128xf32> to vector<64x128xf32>
    %63 = arith.mulf %60, %62 : vector<64x128xf32>
    %c0_30 = arith.constant 0 : index
    %c0_31 = arith.constant 0 : index
    %64 = vector.load %arg13[%c0_30, %c0_31] : memref<1x128xf32, #tpu.memory_space<vmem>>, vector<1x128xf32>
    %65 = vector.broadcast %64 : vector<1x128xf32> to vector<64x128xf32>
    %66 = arith.addf %63, %65 : vector<64x128xf32>
    %67 = arith.truncf %66 : vector<64x128xf32> to vector<64x128xbf16>
    %c0_32 = arith.constant 0 : index
    %c0_33 = arith.constant 0 : index
    %68 = vector.load %arg14[%c0_32, %c0_33] : memref<128x256xbf16, #tpu.memory_space<vmem>>, vector<128x256xbf16>
    %cst_34 = arith.constant dense<0.000000e+00> : vector<64x256xf32>
    %69 = tpu.matmul %67, %68, %cst_34 {dimension_numbers = #tpu.dot_dimension_numbers<[1], [0], [0], [1], [0, 0, 1, 1], [], []>} : vector<64x128xbf16>, vector<128x256xbf16>, vector<64x256xf32> -> vector<64x256xf32>
    %c0_35 = arith.constant 0 : index
    %c0_36 = arith.constant 0 : index
    %70 = vector.load %arg15[%c0_35, %c0_36] : memref<1x256xf32, #tpu.memory_space<vmem>>, vector<1x256xf32>
    %71 = vector.broadcast %70 : vector<1x256xf32> to vector<64x256xf32>
    %72 = arith.addf %69, %71 : vector<64x256xf32>
    %cst_37 = arith.constant 0.000000e+00 : f32
    %73 = vector.broadcast %cst_37 : f32 to vector<64x256xf32>
    %74 = arith.maximumf %72, %73 : vector<64x256xf32>
    %75 = arith.truncf %74 : vector<64x256xf32> to vector<64x256xbf16>
    %c0_38 = arith.constant 0 : index
    %c0_39 = arith.constant 0 : index
    %76 = vector.load %arg16[%c0_38, %c0_39] : memref<256x128xbf16, #tpu.memory_space<vmem>>, vector<256x128xbf16>
    %cst_40 = arith.constant dense<0.000000e+00> : vector<64x128xf32>
    %77 = tpu.matmul %75, %76, %cst_40 {dimension_numbers = #tpu.dot_dimension_numbers<[1], [0], [0], [1], [0, 0, 1, 1], [], []>} : vector<64x256xbf16>, vector<256x128xbf16>, vector<64x128xf32> -> vector<64x128xf32>
    %c0_41 = arith.constant 0 : index
    %c0_42 = arith.constant 0 : index
    %78 = vector.load %arg17[%c0_41, %c0_42] : memref<1x128xf32, #tpu.memory_space<vmem>>, vector<1x128xf32>
    %79 = vector.broadcast %78 : vector<1x128xf32> to vector<64x128xf32>
    %80 = arith.addf %77, %79 : vector<64x128xf32>
    %81 = arith.addf %66, %80 : vector<64x128xf32>
    %cst_43 = arith.constant dense<0.000000e+00> : vector<64xf32>
    %82 = vector.multi_reduction <add>, %81, %cst_43 [1] : vector<64x128xf32> to vector<64xf32>
    %83 = vector.shape_cast %82 : vector<64xf32> to vector<64x1xf32>
    %cst_44 = arith.constant 1.280000e+02 : f32
    %84 = vector.broadcast %cst_44 : f32 to vector<64x1xf32>
    %85 = arith.divf %83, %84 : vector<64x1xf32>
    %86 = vector.broadcast %85 : vector<64x1xf32> to vector<64x128xf32>
    %87 = arith.subf %81, %86 : vector<64x128xf32>
    %88 = arith.mulf %87, %87 : vector<64x128xf32>
    %cst_45 = arith.constant dense<0.000000e+00> : vector<64xf32>
    %89 = vector.multi_reduction <add>, %88, %cst_45 [1] : vector<64x128xf32> to vector<64xf32>
    %90 = vector.shape_cast %89 : vector<64xf32> to vector<64x1xf32>
    %cst_46 = arith.constant 1.280000e+02 : f32
    %91 = vector.broadcast %cst_46 : f32 to vector<64x1xf32>
    %92 = arith.divf %90, %91 : vector<64x1xf32>
    %93 = vector.broadcast %85 : vector<64x1xf32> to vector<64x128xf32>
    %94 = arith.subf %81, %93 : vector<64x128xf32>
    %cst_47 = arith.constant 9.99999974E-6 : f32
    %95 = vector.broadcast %cst_47 : f32 to vector<64x1xf32>
    %96 = arith.addf %92, %95 : vector<64x1xf32>
    %97 = math.rsqrt %96 : vector<64x1xf32>
    %98 = vector.broadcast %97 : vector<64x1xf32> to vector<64x128xf32>
    %99 = arith.mulf %94, %98 : vector<64x128xf32>
    %c0_48 = arith.constant 0 : index
    %c0_49 = arith.constant 0 : index
    %100 = vector.load %arg18[%c0_48, %c0_49] : memref<1x128xf32, #tpu.memory_space<vmem>>, vector<1x128xf32>
    %101 = vector.broadcast %100 : vector<1x128xf32> to vector<64x128xf32>
    %102 = arith.mulf %99, %101 : vector<64x128xf32>
    %c0_50 = arith.constant 0 : index
    %c0_51 = arith.constant 0 : index
    %103 = vector.load %arg19[%c0_50, %c0_51] : memref<1x128xf32, #tpu.memory_space<vmem>>, vector<1x128xf32>
    %104 = vector.broadcast %103 : vector<1x128xf32> to vector<64x128xf32>
    %105 = arith.addf %102, %104 : vector<64x128xf32>
    %c0_52 = arith.constant 0 : index
    %c0_53 = arith.constant 0 : index
    %c0_54 = arith.constant 0 : index
    %106 = vector.load %arg22[%c0_52, %c0_53, %c0_54] : memref<1x64x128xf32, #tpu.memory_space<vmem>>, vector<1x64x128xf32>
    %107 = vector.shape_cast %106 : vector<1x64x128xf32> to vector<64x128xf32>
    %108 = vector.shape_cast %105 : vector<64x128xf32> to vector<1x64x128xf32>
    tpu.vector_store %arg22[%c0_52, %c0_53, %c0_54], %108 {strides = array<i32>} : memref<1x64x128xf32, #tpu.memory_space<vmem>>, vector<1x64x128xf32>,
    %c0_i32_55 = arith.constant 0 : i32
    %109 = arith.cmpi eq, %arg1, %c0_i32_55 : i32
    %110 = arith.extui %109 : i1 to i32
    %c0_i32_56 = arith.constant 0 : i32
    %111 = arith.cmpi ne, %110, %c0_i32_56 : i32
    scf.if %111 {
      %112 = vector.extract_strided_slice %105 {offsets = [0, 0], sizes = [8, 128], strides = [1, 1]} : vector<64x128xf32> to vector<8x128xf32>
      %113 = arith.truncf %112 : vector<8x128xf32> to vector<8x128xbf16>
      %c0_57 = arith.constant 0 : index
      %c0_58 = arith.constant 0 : index
      %114 = vector.load %arg20[%c0_57, %c0_58] : memref<128x128xbf16, #tpu.memory_space<vmem>>, vector<128x128xbf16>
      %cst_59 = arith.constant dense<0.000000e+00> : vector<8x128xf32>
      %115 = tpu.matmul %113, %114, %cst_59 {dimension_numbers = #tpu.dot_dimension_numbers<[1], [0], [0], [1], [0, 0, 1, 1], [], []>} : vector<8x128xbf16>, vector<128x128xbf16>, vector<8x128xf32> -> vector<8x128xf32>
      %c0_60 = arith.constant 0 : index
      %c0_61 = arith.constant 0 : index
      %116 = vector.load %arg21[%c0_60, %c0_61] : memref<1x128xf32, #tpu.memory_space<vmem>>, vector<1x128xf32>
      %117 = vector.broadcast %116 : vector<1x128xf32> to vector<8x128xf32>
      %118 = arith.addf %115, %117 : vector<8x128xf32>
      %c0_62 = arith.constant 0 : index
      %c0_63 = arith.constant 0 : index
      %c0_64 = arith.constant 0 : index
      %119 = vector.load %arg23[%c0_62, %c0_63, %c0_64] : memref<1x8x128xf32, #tpu.memory_space<vmem>>, vector<1x8x128xf32>
      %120 = vector.shape_cast %119 : vector<1x8x128xf32> to vector<8x128xf32>
      %121 = vector.shape_cast %118 : vector<8x128xf32> to vector<1x8x128xf32>
      tpu.vector_store %arg23[%c0_62, %c0_63, %c0_64], %121 {strides = array<i32>} : memref<1x8x128xf32, #tpu.memory_space<vmem>>, vector<1x8x128xf32>,
    } else {
    }
    return
  }
  func.func @transform_0(%arg0: i32, %arg1: i32) -> (i32, i32, i32) {
    %c0_i32 = arith.constant 0 : i32
    %c0_i32_0 = arith.constant 0 : i32
    %c0_i32_1 = arith.constant 0 : i32
    return %arg0, %c0_i32, %c0_i32_0 : i32, i32, i32
  }
  func.func @transform_1(%arg0: i32, %arg1: i32) -> (i32, i32, i32) {
    %c0_i32 = arith.constant 0 : i32
    %c0_i32_0 = arith.constant 0 : i32
    %c0_i32_1 = arith.constant 0 : i32
    return %arg0, %c0_i32, %c0_i32_0 : i32, i32, i32
  }
  func.func @transform_2(%arg0: i32, %arg1: i32) -> (i32, i32) {
    %c0_i32 = arith.constant 0 : i32
    %c0_i32_0 = arith.constant 0 : i32
    %c0_i32_1 = arith.constant 0 : i32
    return %c0_i32, %c0_i32_0 : i32, i32
  }
  func.func @transform_3(%arg0: i32, %arg1: i32) -> (i32, i32) {
    %c0_i32 = arith.constant 0 : i32
    %c0_i32_0 = arith.constant 0 : i32
    %c0_i32_1 = arith.constant 0 : i32
    return %c0_i32, %c0_i32_0 : i32, i32
  }
  func.func @transform_4(%arg0: i32, %arg1: i32) -> (i32, i32) {
    %c0_i32 = arith.constant 0 : i32
    %c0_i32_0 = arith.constant 0 : i32
    %c0_i32_1 = arith.constant 0 : i32
    return %c0_i32, %c0_i32_0 : i32, i32
  }
  func.func @transform_5(%arg0: i32, %arg1: i32) -> (i32, i32) {
    %c0_i32 = arith.constant 0 : i32
    %c0_i32_0 = arith.constant 0 : i32
    %c0_i32_1 = arith.constant 0 : i32
    return %c0_i32, %c0_i32_0 : i32, i32
  }
  func.func @transform_6(%arg0: i32, %arg1: i32) -> (i32, i32) {
    %c0_i32 = arith.constant 0 : i32
    %c0_i32_0 = arith.constant 0 : i32
    %c0_i32_1 = arith.constant 0 : i32
    return %c0_i32, %c0_i32_0 : i32, i32
  }
  func.func @transform_7(%arg0: i32, %arg1: i32) -> (i32, i32) {
    %c0_i32 = arith.constant 0 : i32
    %c0_i32_0 = arith.constant 0 : i32
    %c0_i32_1 = arith.constant 0 : i32
    return %c0_i32, %c0_i32_0 : i32, i32
  }
  func.func @transform_8(%arg0: i32, %arg1: i32) -> (i32, i32) {
    %c0_i32 = arith.constant 0 : i32
    %c0_i32_0 = arith.constant 0 : i32
    %c0_i32_1 = arith.constant 0 : i32
    return %c0_i32, %c0_i32_0 : i32, i32
  }
  func.func @transform_9(%arg0: i32, %arg1: i32) -> (i32, i32) {
    %c0_i32 = arith.constant 0 : i32
    %c0_i32_0 = arith.constant 0 : i32
    %c0_i32_1 = arith.constant 0 : i32
    return %c0_i32, %c0_i32_0 : i32, i32
  }
  func.func @transform_10(%arg0: i32, %arg1: i32) -> (i32, i32) {
    %c0_i32 = arith.constant 0 : i32
    %c0_i32_0 = arith.constant 0 : i32
    %c0_i32_1 = arith.constant 0 : i32
    return %c0_i32, %c0_i32_0 : i32, i32
  }
  func.func @transform_11(%arg0: i32, %arg1: i32) -> (i32, i32) {
    %c0_i32 = arith.constant 0 : i32
    %c0_i32_0 = arith.constant 0 : i32
    %c0_i32_1 = arith.constant 0 : i32
    return %c0_i32, %c0_i32_0 : i32, i32
  }
  func.func @transform_12(%arg0: i32, %arg1: i32) -> (i32, i32) {
    %c0_i32 = arith.constant 0 : i32
    %c0_i32_0 = arith.constant 0 : i32
    %c0_i32_1 = arith.constant 0 : i32
    return %c0_i32, %c0_i32_0 : i32, i32
  }
  func.func @transform_13(%arg0: i32, %arg1: i32) -> (i32, i32) {
    %c0_i32 = arith.constant 0 : i32
    %c0_i32_0 = arith.constant 0 : i32
    %c0_i32_1 = arith.constant 0 : i32
    return %c0_i32, %c0_i32_0 : i32, i32
  }
  func.func @transform_14(%arg0: i32, %arg1: i32) -> (i32, i32) {
    %c0_i32 = arith.constant 0 : i32
    %c0_i32_0 = arith.constant 0 : i32
    %c0_i32_1 = arith.constant 0 : i32
    return %c0_i32, %c0_i32_0 : i32, i32
  }
  func.func @transform_15(%arg0: i32, %arg1: i32) -> (i32, i32) {
    %c0_i32 = arith.constant 0 : i32
    %c0_i32_0 = arith.constant 0 : i32
    %c0_i32_1 = arith.constant 0 : i32
    return %c0_i32, %c0_i32_0 : i32, i32
  }
  func.func @transform_16(%arg0: i32, %arg1: i32) -> (i32, i32) {
    %c0_i32 = arith.constant 0 : i32
    %c0_i32_0 = arith.constant 0 : i32
    %c0_i32_1 = arith.constant 0 : i32
    return %c0_i32, %c0_i32_0 : i32, i32
  }
  func.func @transform_17(%arg0: i32, %arg1: i32) -> (i32, i32) {
    %c0_i32 = arith.constant 0 : i32
    %c0_i32_0 = arith.constant 0 : i32
    %c0_i32_1 = arith.constant 0 : i32
    return %c0_i32, %c0_i32_0 : i32, i32
  }
  func.func @transform_18(%arg0: i32, %arg1: i32) -> (i32, i32) {
    %c0_i32 = arith.constant 0 : i32
    %c0_i32_0 = arith.constant 0 : i32
    %c0_i32_1 = arith.constant 0 : i32
    return %c0_i32, %c0_i32_0 : i32, i32
  }
  func.func @transform_19(%arg0: i32, %arg1: i32) -> (i32, i32) {
    %c0_i32 = arith.constant 0 : i32
    %c0_i32_0 = arith.constant 0 : i32
    %c0_i32_1 = arith.constant 0 : i32
    return %c0_i32, %c0_i32_0 : i32, i32
  }
  func.func @transform_20(%arg0: i32, %arg1: i32) -> (i32, i32, i32) {
    %c0_i32 = arith.constant 0 : i32
    %c0_i32_0 = arith.constant 0 : i32
    return %arg0, %arg1, %c0_i32 : i32, i32, i32
  }
  func.func @transform_21(%arg0: i32, %arg1: i32) -> (i32, i32, i32) {
    %c0_i32 = arith.constant 0 : i32
    %c0_i32_0 = arith.constant 0 : i32
    %c0_i32_1 = arith.constant 0 : i32
    return %arg0, %c0_i32, %c0_i32_0 : i32, i32, i32
  }
}

</mosaic_0001>

<llo_original>
// kernel: multitask_forward.1
$region0: #{multitask_forward.1}
  #allocation0 [shape = 'u32[]', space=smem, size = 0x4, offset = 0x4, fixed_abs, tag = 'smem constant byte address 0x4 - core index']
  #allocation1 [shape = 'u32[144,128]{1,0:T(1,128)}', space=vmem, size = 0x12000, scoped, tag = 'internal scratch']
  #allocation2 [shape = 'bf16[128,128]{1,0:T(16,128)(2,1)}', space=vmem, size = 0x8000, scoped, tag = 'scratch operand']
  #allocation3 [shape = 'bf16[128,128]{1,0:T(16,128)(2,1)}', space=vmem, size = 0x8000, scoped, tag = 'scratch operand']
  %s0 = inlined_call_operand.vmem [shape: bf16[2,128,128], index: 0, kind: input, shape index: {}]
  %s1 = inlined_call_operand.vmem [shape: f32[2,1,128], index: 1, kind: input, shape index: {}]
  %s2 = inlined_call_operand.vmem [shape: bf16[128,128], index: 2, kind: input, shape index: {}]
  %s3 = inlined_call_operand.vmem [shape: f32[1,128], index: 3, kind: input, shape index: {}]
  %s4 = inlined_call_operand.vmem [shape: bf16[128,128], index: 4, kind: input, shape index: {}]
  %s5 = inlined_call_operand.vmem [shape: f32[1,128], index: 5, kind: input, shape index: {}]
  %s6 = inlined_call_operand.vmem [shape: bf16[128,128], index: 6, kind: input, shape index: {}]
  %s7 = inlined_call_operand.vmem [shape: f32[1,128], index: 7, kind: input, shape index: {}]
  %s8 = inlined_call_operand.vmem [shape: bf16[128,128], index: 8, kind: input, shape index: {}]
  %s9 = inlined_call_operand.vmem [shape: f32[1,128], index: 9, kind: input, shape index: {}]
  %s10 = inlined_call_operand.vmem [shape: f32[1,128], index: 10, kind: input, shape index: {}]
  %s11 = inlined_call_operand.vmem [shape: f32[1,128], index: 11, kind: input, shape index: {}]
  %s12 = inlined_call_operand.vmem [shape: bf16[128,256], index: 12, kind: input, shape index: {}]
  %s13 = inlined_call_operand.vmem [shape: f32[1,256], index: 13, kind: input, shape index: {}]
  %s14 = inlined_call_operand.vmem [shape: bf16[256,128], index: 14, kind: input, shape index: {}]
  %s15 = inlined_call_operand.vmem [shape: f32[1,128], index: 15, kind: input, shape index: {}]
  %s16 = inlined_call_operand.vmem [shape: f32[1,128], index: 16, kind: input, shape index: {}]
  %s17 = inlined_call_operand.vmem [shape: f32[1,128], index: 17, kind: input, shape index: {}]
  %s18 = inlined_call_operand.vmem [shape: bf16[128,128], index: 18, kind: input, shape index: {}]
  %s19 = inlined_call_operand.vmem [shape: f32[1,128], index: 19, kind: input, shape index: {}]
  %s20 = inlined_call_operand.hbm [shape: f32[2,128,128], index: 20, kind: output, shape index: {0}]
  %s21 = inlined_call_operand.vmem [shape: f32[2,8,128], index: 21, kind: output, shape index: {1}]
  %22 = xla_tuple %s20, %s21
  %s23 = sld [smem:[#allocation0]]
  $region129: #{multitask_forward.1} parent=0
    _
  %s25 = ssub.s32 1, %s23
  %s26 = scalar_select 0, %s25, %s23
  $region1: #{multitask_forward.1} parent=0
    #allocation4 [shape = 'u8[65536]{0}', space=vmem, size = 0x10000, scoped, tag = 'output window, operand 0']
    #allocation5 [shape = 's32[2]{0}', space=sflag, size = 0x8, scoped, tag = 'scoped memory for multitask_forward.1']
    %27 = vsyncpa [#allocation5], 0
    %s28 = scalar_lea.sflag [#allocation5], 1
    %29 = vsyncpa %s28, 0
    loop: start=0, step=1, limit=6
    $region2: #{multitask_forward.1} parent=1 // loop_pre_header
      _
    $region3: #{multitask_forward.1} parent=1 // loop_header
      %s31 = sphi 0, %s35
      %p32 = scmp.ge.s32.totalorder %s31, 6
      %s38 = sphi 0, %s50
      %s39 = sphi 0, %s46
      %s40 = sphi 0, %s38
      %s41 = sphi 0, %s39
      %s42 = sphi 0, %s40
      %s43 = sphi 0, %s41
      %s53 = sphi 0, %s55
      %s56 = sphi 0, %s53
      %s57 = sphi 0, %s56
      %s73 = sphi 0, %s57
      %s79 = sphi 0, %s81
      %s82 = sphi 0, %s79
      %s83 = sphi 0, %s82
      %s99 = sphi 0, %s83
      %s103 = sphi 0, %s103
      %s105 = sphi 0, %s103
      %s106 = sphi 0, %s105
      %s120 = sphi 0, %s106
      %s124 = sphi 0, %s124
      %s126 = sphi 0, %s124
      %s127 = sphi 0, %s126
      %s141 = sphi 0, %s127
      %s145 = sphi 0, %s145
      %s147 = sphi 0, %s145
      %s148 = sphi 0, %s147
      %s162 = sphi 0, %s148
      %s166 = sphi 0, %s166
      %s168 = sphi 0, %s166
      %s169 = sphi 0, %s168
      %s183 = sphi 0, %s169
      %s187 = sphi 0, %s187
      %s189 = sphi 0, %s187
      %s190 = sphi 0, %s189
      %s204 = sphi 0, %s190
      %s208 = sphi 0, %s208
      %s210 = sphi 0, %s208
      %s211 = sphi 0, %s210
      %s225 = sphi 0, %s211
      %s229 = sphi 0, %s229
      %s231 = sphi 0, %s229
      %s232 = sphi 0, %s231
      %s246 = sphi 0, %s232
      %s250 = sphi 0, %s250
      %s252 = sphi 0, %s250
      %s253 = sphi 0, %s252
      %s267 = sphi 0, %s253
      %s271 = sphi 0, %s271
      %s273 = sphi 0, %s271
      %s274 = sphi 0, %s273
      %s288 = sphi 0, %s274
      %s292 = sphi 0, %s292
      %s294 = sphi 0, %s292
      %s295 = sphi 0, %s294
      %s309 = sphi 0, %s295
      %s313 = sphi 0, %s313
      %s315 = sphi 0, %s313
      %s316 = sphi 0, %s315
      %s330 = sphi 0, %s316
      %s334 = sphi 0, %s334
      %s336 = sphi 0, %s334
      %s337 = sphi 0, %s336
      %s351 = sphi 0, %s337
      %s355 = sphi 0, %s355
      %s357 = sphi 0, %s355
      %s358 = sphi 0, %s357
      %s372 = sphi 0, %s358
      %s376 = sphi 0, %s376
      %s378 = sphi 0, %s376
      %s379 = sphi 0, %s378
      %s393 = sphi 0, %s379
      %s397 = sphi 0, %s397
      %s399 = sphi 0, %s397
      %s400 = sphi 0, %s399
      %s414 = sphi 0, %s400
      %s418 = sphi 0, %s418
      %s420 = sphi 0, %s418
      %s421 = sphi 0, %s420
      %s435 = sphi 0, %s421
      %s439 = sphi 0, %s439
      %s441 = sphi 0, %s439
      %s442 = sphi 0, %s441
      %s456 = sphi 0, %s442
      %s460 = sphi 0, %s460
      %s462 = sphi 0, %s460
      %s463 = sphi 0, %s462
      %s477 = sphi 0, %s463
      %s485 = sphi 0, %s487
      %s488 = sphi 0, %s485
      %s489 = sphi 0, %s488
      %s505 = sphi 0, %s489
      %s511 = sphi 0, %s513
      %s514 = sphi 0, %s511
      %s515 = sphi 0, %s514
      %s531 = sphi 0, %s515
    $region4: #{multitask_forward.1} parent=1 // loop_header_branch
      %34 = sbr.rel (%p32) target = $region8
    $region5: #{multitask_forward.1} parent=1 // loop_body
      %s36 = ssub.s32 %s31, 1
      %s37 = ssub.s32 %s31, 2
      %s44 = sadd.s32 1, %s39
      %p45 = scmp.ge.s32.totalorder %s44, 2
      %s46 = scalar_select %p45, 0, %s44
      %s47 = sadd.s32 1, %s38
      %s48 = scalar_select %p45, %s47, %s38
      %p49 = scmp.ge.s32.totalorder %s48, 2
      %s50 = scalar_select %p49, 0, %s48
      %s51 = ssub.s32 %s38, %s50
      %p52 = scmp.eq.s32.totalorder %s51, 0
      %s54 = sadd.s32 %s53, 1
      %s55 = scalar_select %p52, %s53, %s54
      %p58 = pneg %p52
      %p59 = scmp.eq.s32.totalorder %s31, 3
      %p60 = por %p58, %p59
      %p61 = scmp.ne.s32.totalorder %s53, %s56
      %p62 = scmp.eq.s32.totalorder %s31, 0
      %p63 = por %p61, %p62
      %p64 = scmp.ne.s32.totalorder %s53, %s56
      %p65 = scmp.eq.s32.totalorder %s36, 3
      %p66 = por %p64, %p65
      %p67 = scmp.ne.s32.totalorder %s56, %s57
      %p68 = scmp.eq.s32.totalorder %s36, 0
      %p69 = por %p67, %p68
      %p70 = scmp.ne.s32.totalorder %s56, %s57
      %p71 = scmp.eq.s32.totalorder %s37, 3
      %p72 = por %p70, %p71
      %p74 = scmp.ne.s32.totalorder %s57, %s73
      %p75 = scmp.eq.s32.totalorder %s37, 0
      %p76 = por %p74, %p75
      %s77 = ssub.s32 %s38, %s50
      %p78 = scmp.eq.s32.totalorder %s77, 0
      %s80 = sadd.s32 %s79, 1
      %s81 = scalar_select %p78, %s79, %s80
      %p84 = pneg %p78
      %p85 = scmp.eq.s32.totalorder %s31, 3
      %p86 = por %p84, %p85
      %p87 = scmp.ne.s32.totalorder %s79, %s82
      %p88 = scmp.eq.s32.totalorder %s31, 0
      %p89 = por %p87, %p88
      %p90 = scmp.ne.s32.totalorder %s79, %s82
      %p91 = scmp.eq.s32.totalorder %s36, 3
      %p92 = por %p90, %p91
      %p93 = scmp.ne.s32.totalorder %s82, %s83
      %p94 = scmp.eq.s32.totalorder %s36, 0
      %p95 = por %p93, %p94
      %p96 = scmp.ne.s32.totalorder %s82, %s83
      %p97 = scmp.eq.s32.totalorder %s37, 3
      %p98 = por %p96, %p97
      %p100 = scmp.ne.s32.totalorder %s83, %s99
      %p101 = scmp.eq.s32.totalorder %s37, 0
      %p102 = por %p100, %p101
      %s104 = sadd.s32 %s103, 1
      %p107 = scmp.eq.s32.totalorder %s31, 3
      %p108 = scmp.ne.s32.totalorder %s103, %s105
      %p109 = scmp.eq.s32.totalorder %s31, 0
      %p110 = por %p108, %p109
      %p111 = scmp.ne.s32.totalorder %s103, %s105
      %p112 = scmp.eq.s32.totalorder %s36, 3
      %p113 = por %p111, %p112
      %p114 = scmp.ne.s32.totalorder %s105, %s106
      %p115 = scmp.eq.s32.totalorder %s36, 0
      %p116 = por %p114, %p115
      %p117 = scmp.ne.s32.totalorder %s105, %s106
      %p118 = scmp.eq.s32.totalorder %s37, 3
      %p119 = por %p117, %p118
      %p121 = scmp.ne.s32.totalorder %s106, %s120
      %p122 = scmp.eq.s32.totalorder %s37, 0
      %p123 = por %p121, %p122
      %s125 = sadd.s32 %s124, 1
      %p128 = scmp.eq.s32.totalorder %s31, 3
      %p129 = scmp.ne.s32.totalorder %s124, %s126
      %p130 = scmp.eq.s32.totalorder %s31, 0
      %p131 = por %p129, %p130
      %p132 = scmp.ne.s32.totalorder %s124, %s126
      %p133 = scmp.eq.s32.totalorder %s36, 3
      %p134 = por %p132, %p133
      %p135 = scmp.ne.s32.totalorder %s126, %s127
      %p136 = scmp.eq.s32.totalorder %s36, 0
      %p137 = por %p135, %p136
      %p138 = scmp.ne.s32.totalorder %s126, %s127
      %p139 = scmp.eq.s32.totalorder %s37, 3
      %p140 = por %p138, %p139
      %p142 = scmp.ne.s32.totalorder %s127, %s141
      %p143 = scmp.eq.s32.totalorder %s37, 0
      %p144 = por %p142, %p143
      %s146 = sadd.s32 %s145, 1
      %p149 = scmp.eq.s32.totalorder %s31, 3
      %p150 = scmp.ne.s32.totalorder %s145, %s147
      %p151 = scmp.eq.s32.totalorder %s31, 0
      %p152 = por %p150, %p151
      %p153 = scmp.ne.s32.totalorder %s145, %s147
      %p154 = scmp.eq.s32.totalorder %s36, 3
      %p155 = por %p153, %p154
      %p156 = scmp.ne.s32.totalorder %s147, %s148
      %p157 = scmp.eq.s32.totalorder %s36, 0
      %p158 = por %p156, %p157
      %p159 = scmp.ne.s32.totalorder %s147, %s148
      %p160 = scmp.eq.s32.totalorder %s37, 3
      %p161 = por %p159, %p160
      %p163 = scmp.ne.s32.totalorder %s148, %s162
      %p164 = scmp.eq.s32.totalorder %s37, 0
      %p165 = por %p163, %p164
      %s167 = sadd.s32 %s166, 1
      %p170 = scmp.eq.s32.totalorder %s31, 3
      %p171 = scmp.ne.s32.totalorder %s166, %s168
      %p172 = scmp.eq.s32.totalorder %s31, 0
      %p173 = por %p171, %p172
      %p174 = scmp.ne.s32.totalorder %s166, %s168
      %p175 = scmp.eq.s32.totalorder %s36, 3
      %p176 = por %p174, %p175
      %p177 = scmp.ne.s32.totalorder %s168, %s169
      %p178 = scmp.eq.s32.totalorder %s36, 0
      %p179 = por %p177, %p178
      %p180 = scmp.ne.s32.totalorder %s168, %s169
      %p181 = scmp.eq.s32.totalorder %s37, 3
      %p182 = por %p180, %p181
      %p184 = scmp.ne.s32.totalorder %s169, %s183
      %p185 = scmp.eq.s32.totalorder %s37, 0
      %p186 = por %p184, %p185
      %s188 = sadd.s32 %s187, 1
      %p191 = scmp.eq.s32.totalorder %s31, 3
      %p192 = scmp.ne.s32.totalorder %s187, %s189
      %p193 = scmp.eq.s32.totalorder %s31, 0
      %p194 = por %p192, %p193
      %p195 = scmp.ne.s32.totalorder %s187, %s189
      %p196 = scmp.eq.s32.totalorder %s36, 3
      %p197 = por %p195, %p196
      %p198 = scmp.ne.s32.totalorder %s189, %s190
      %p199 = scmp.eq.s32.totalorder %s36, 0
      %p200 = por %p198, %p199
      %p201 = scmp.ne.s32.totalorder %s189, %s190
      %p202 = scmp.eq.s32.totalorder %s37, 3
      %p203 = por %p201, %p202
      %p205 = scmp.ne.s32.totalorder %s190, %s204
      %p206 = scmp.eq.s32.totalorder %s37, 0
      %p207 = por %p205, %p206
      %s209 = sadd.s32 %s208, 1
      %p212 = scmp.eq.s32.totalorder %s31, 3
      %p213 = scmp.ne.s32.totalorder %s208, %s210
      %p214 = scmp.eq.s32.totalorder %s31, 0
      %p215 = por %p213, %p214
      %p216 = scmp.ne.s32.totalorder %s208, %s210
      %p217 = scmp.eq.s32.totalorder %s36, 3
      %p218 = por %p216, %p217
      %p219 = scmp.ne.s32.totalorder %s210, %s211
      %p220 = scmp.eq.s32.totalorder %s36, 0
      %p221 = por %p219, %p220
      %p222 = scmp.ne.s32.totalorder %s210, %s211
      %p223 = scmp.eq.s32.totalorder %s37, 3
      %p224 = por %p222, %p223
      %p226 = scmp.ne.s32.totalorder %s211, %s225
      %p227 = scmp.eq.s32.totalorder %s37, 0
      %p228 = por %p226, %p227
      %s230 = sadd.s32 %s229, 1
      %p233 = scmp.eq.s32.totalorder %s31, 3
      %p234 = scmp.ne.s32.totalorder %s229, %s231
      %p235 = scmp.eq.s32.totalorder %s31, 0
      %p236 = por %p234, %p235
      %p237 = scmp.ne.s32.totalorder %s229, %s231
      %p238 = scmp.eq.s32.totalorder %s36, 3
      %p239 = por %p237, %p238
      %p240 = scmp.ne.s32.totalorder %s231, %s232
      %p241 = scmp.eq.s32.totalorder %s36, 0
      %p242 = por %p240, %p241
      %p243 = scmp.ne.s32.totalorder %s231, %s232
      %p244 = scmp.eq.s32.totalorder %s37, 3
      %p245 = por %p243, %p244
      %p247 = scmp.ne.s32.totalorder %s232, %s246
      %p248 = scmp.eq.s32.totalorder %s37, 0
      %p249 = por %p247, %p248
      %s251 = sadd.s32 %s250, 1
      %p254 = scmp.eq.s32.totalorder %s31, 3
      %p255 = scmp.ne.s32.totalorder %s250, %s252
      %p256 = scmp.eq.s32.totalorder %s31, 0
      %p257 = por %p255, %p256
      %p258 = scmp.ne.s32.totalorder %s250, %s252
      %p259 = scmp.eq.s32.totalorder %s36, 3
      %p260 = por %p258, %p259
      %p261 = scmp.ne.s32.totalorder %s252, %s253
      %p262 = scmp.eq.s32.totalorder %s36, 0
      %p263 = por %p261, %p262
      %p264 = scmp.ne.s32.totalorder %s252, %s253
      %p265 = scmp.eq.s32.totalorder %s37, 3
      %p266 = por %p264, %p265
      %p268 = scmp.ne.s32.totalorder %s253, %s267
      %p269 = scmp.eq.s32.totalorder %s37, 0
      %p270 = por %p268, %p269
      %s272 = sadd.s32 %s271, 1
      %p275 = scmp.eq.s32.totalorder %s31, 3
      %p276 = scmp.ne.s32.totalorder %s271, %s273
      %p277 = scmp.eq.s32.totalorder %s31, 0
      %p278 = por %p276, %p277
      %p279 = scmp.ne.s32.totalorder %s271, %s273
      %p280 = scmp.eq.s32.totalorder %s36, 3
      %p281 = por %p279, %p280
      %p282 = scmp.ne.s32.totalorder %s273, %s274
      %p283 = scmp.eq.s32.totalorder %s36, 0
      %p284 = por %p282, %p283
      %p285 = scmp.ne.s32.totalorder %s273, %s274
      %p286 = scmp.eq.s32.totalorder %s37, 3
      %p287 = por %p285, %p286
      %p289 = scmp.ne.s32.totalorder %s274, %s288
      %p290 = scmp.eq.s32.totalorder %s37, 0
      %p291 = por %p289, %p290
      %s293 = sadd.s32 %s292, 1
      %p296 = scmp.eq.s32.totalorder %s31, 3
      %p297 = scmp.ne.s32.totalorder %s292, %s294
      %p298 = scmp.eq.s32.totalorder %s31, 0
      %p299 = por %p297, %p298
      %p300 = scmp.ne.s32.totalorder %s292, %s294
      %p301 = scmp.eq.s32.totalorder %s36, 3
      %p302 = por %p300, %p301
      %p303 = scmp.ne.s32.totalorder %s294, %s295
      %p304 = scmp.eq.s32.totalorder %s36, 0
      %p305 = por %p303, %p304
      %p306 = scmp.ne.s32.totalorder %s294, %s295
      %p307 = scmp.eq.s32.totalorder %s37, 3
      %p308 = por %p306, %p307
      %p310 = scmp.ne.s32.totalorder %s295, %s309
      %p311 = scmp.eq.s32.totalorder %s37, 0
      %p312 = por %p310, %p311
      %s314 = sadd.s32 %s313, 1
      %p317 = scmp.eq.s32.totalorder %s31, 3
      %p318 = scmp.ne.s32.totalorder %s313, %s315
      %p319 = scmp.eq.s32.totalorder %s31, 0
      %p320 = por %p318, %p319
      %p321 = scmp.ne.s32.totalorder %s313, %s315
      %p322 = scmp.eq.s32.totalorder %s36, 3
      %p323 = por %p321, %p322
      %p324 = scmp.ne.s32.totalorder %s315, %s316
      %p325 = scmp.eq.s32.totalorder %s36, 0
      %p326 = por %p324, %p325
      %p327 = scmp.ne.s32.totalorder %s315, %s316
      %p328 = scmp.eq.s32.totalorder %s37, 3
      %p329 = por %p327, %p328
      %p331 = scmp.ne.s32.totalorder %s316, %s330
      %p332 = scmp.eq.s32.totalorder %s37, 0
      %p333 = por %p331, %p332
      %s335 = sadd.s32 %s334, 1
      %p338 = scmp.eq.s32.totalorder %s31, 3
      %p339 = scmp.ne.s32.totalorder %s334, %s336
      %p340 = scmp.eq.s32.totalorder %s31, 0
      %p341 = por %p339, %p340
      %p342 = scmp.ne.s32.totalorder %s334, %s336
      %p343 = scmp.eq.s32.totalorder %s36, 3
      %p344 = por %p342, %p343
      %p345 = scmp.ne.s32.totalorder %s336, %s337
      %p346 = scmp.eq.s32.totalorder %s36, 0
      %p347 = por %p345, %p346
      %p348 = scmp.ne.s32.totalorder %s336, %s337
      %p349 = scmp.eq.s32.totalorder %s37, 3
      %p350 = por %p348, %p349
      %p352 = scmp.ne.s32.totalorder %s337, %s351
      %p353 = scmp.eq.s32.totalorder %s37, 0
      %p354 = por %p352, %p353
      %s356 = sadd.s32 %s355, 1
      %p359 = scmp.eq.s32.totalorder %s31, 3
      %p360 = scmp.ne.s32.totalorder %s355, %s357
      %p361 = scmp.eq.s32.totalorder %s31, 0
      %p362 = por %p360, %p361
      %p363 = scmp.ne.s32.totalorder %s355, %s357
      %p364 = scmp.eq.s32.totalorder %s36, 3
      %p365 = por %p363, %p364
      %p366 = scmp.ne.s32.totalorder %s357, %s358
      %p367 = scmp.eq.s32.totalorder %s36, 0
      %p368 = por %p366, %p367
      %p369 = scmp.ne.s32.totalorder %s357, %s358
      %p370 = scmp.eq.s32.totalorder %s37, 3
      %p371 = por %p369, %p370
      %p373 = scmp.ne.s32.totalorder %s358, %s372
      %p374 = scmp.eq.s32.totalorder %s37, 0
      %p375 = por %p373, %p374
      %s377 = sadd.s32 %s376, 1
      %p380 = scmp.eq.s32.totalorder %s31, 3
      %p381 = scmp.ne.s32.totalorder %s376, %s378
      %p382 = scmp.eq.s32.totalorder %s31, 0
      %p383 = por %p381, %p382
      %p384 = scmp.ne.s32.totalorder %s376, %s378
      %p385 = scmp.eq.s32.totalorder %s36, 3
      %p386 = por %p384, %p385
      %p387 = scmp.ne.s32.totalorder %s378, %s379
      %p388 = scmp.eq.s32.totalorder %s36, 0
      %p389 = por %p387, %p388
      %p390 = scmp.ne.s32.totalorder %s378, %s379
      %p391 = scmp.eq.s32.totalorder %s37, 3
      %p392 = por %p390, %p391
      %p394 = scmp.ne.s32.totalorder %s379, %s393
      %p395 = scmp.eq.s32.totalorder %s37, 0
      %p396 = por %p394, %p395
      %s398 = sadd.s32 %s397, 1
      %p401 = scmp.eq.s32.totalorder %s31, 3
      %p402 = scmp.ne.s32.totalorder %s397, %s399
      %p403 = scmp.eq.s32.totalorder %s31, 0
      %p404 = por %p402, %p403
      %p405 = scmp.ne.s32.totalorder %s397, %s399
      %p406 = scmp.eq.s32.totalorder %s36, 3
      %p407 = por %p405, %p406
      %p408 = scmp.ne.s32.totalorder %s399, %s400
      %p409 = scmp.eq.s32.totalorder %s36, 0
      %p410 = por %p408, %p409
      %p411 = scmp.ne.s32.totalorder %s399, %s400
      %p412 = scmp.eq.s32.totalorder %s37, 3
      %p413 = por %p411, %p412
      %p415 = scmp.ne.s32.totalorder %s400, %s414
      %p416 = scmp.eq.s32.totalorder %s37, 0
      %p417 = por %p415, %p416
      %s419 = sadd.s32 %s418, 1
      %p422 = scmp.eq.s32.totalorder %s31, 3
      %p423 = scmp.ne.s32.totalorder %s418, %s420
      %p424 = scmp.eq.s32.totalorder %s31, 0
      %p425 = por %p423, %p424
      %p426 = scmp.ne.s32.totalorder %s418, %s420
      %p427 = scmp.eq.s32.totalorder %s36, 3
      %p428 = por %p426, %p427
      %p429 = scmp.ne.s32.totalorder %s420, %s421
      %p430 = scmp.eq.s32.totalorder %s36, 0
      %p431 = por %p429, %p430
      %p432 = scmp.ne.s32.totalorder %s420, %s421
      %p433 = scmp.eq.s32.totalorder %s37, 3
      %p434 = por %p432, %p433
      %p436 = scmp.ne.s32.totalorder %s421, %s435
      %p437 = scmp.eq.s32.totalorder %s37, 0
      %p438 = por %p436, %p437
      %s440 = sadd.s32 %s439, 1
      %p443 = scmp.eq.s32.totalorder %s31, 3
      %p444 = scmp.ne.s32.totalorder %s439, %s441
      %p445 = scmp.eq.s32.totalorder %s31, 0
      %p446 = por %p444, %p445
      %p447 = scmp.ne.s32.totalorder %s439, %s441
      %p448 = scmp.eq.s32.totalorder %s36, 3
      %p449 = por %p447, %p448
      %p450 = scmp.ne.s32.totalorder %s441, %s442
      %p451 = scmp.eq.s32.totalorder %s36, 0
      %p452 = por %p450, %p451
      %p453 = scmp.ne.s32.totalorder %s441, %s442
      %p454 = scmp.eq.s32.totalorder %s37, 3
      %p455 = por %p453, %p454
      %p457 = scmp.ne.s32.totalorder %s442, %s456
      %p458 = scmp.eq.s32.totalorder %s37, 0
      %p459 = por %p457, %p458
      %s461 = sadd.s32 %s460, 1
      %p464 = scmp.eq.s32.totalorder %s31, 3
      %p465 = scmp.ne.s32.totalorder %s460, %s462
      %p466 = scmp.eq.s32.totalorder %s31, 0
      %p467 = por %p465, %p466
      %p468 = scmp.ne.s32.totalorder %s460, %s462
      %p469 = scmp.eq.s32.totalorder %s36, 3
      %p470 = por %p468, %p469
      %p471 = scmp.ne.s32.totalorder %s462, %s463
      %p472 = scmp.eq.s32.totalorder %s36, 0
      %p473 = por %p471, %p472
      %p474 = scmp.ne.s32.totalorder %s462, %s463
      %p475 = scmp.eq.s32.totalorder %s37, 3
      %p476 = por %p474, %p475
      %p478 = scmp.ne.s32.totalorder %s463, %s477
      %p479 = scmp.eq.s32.totalorder %s37, 0
      %p480 = por %p478, %p479
      %s481 = ssub.s32 %s38, %s50
      %s482 = ssub.s32 %s39, %s46
      %s483 = sor.u32 %s481, %s482
      %p484 = scmp.eq.s32.totalorder %s483, 0
      %s486 = sadd.s32 %s485, 1
      %s487 = scalar_select %p484, %s485, %s486
      %p490 = pneg %p484
      %p491 = scmp.eq.s32.totalorder %s31, 3
      %p492 = por %p490, %p491
      %p493 = scmp.ne.s32.totalorder %s485, %s488
      %p494 = scmp.eq.s32.totalorder %s31, 0
      %p495 = por %p493, %p494
      %p496 = scmp.ne.s32.totalorder %s485, %s488
      %p497 = scmp.eq.s32.totalorder %s36, 3
      %p498 = por %p496, %p497
      %p499 = scmp.ne.s32.totalorder %s488, %s489
      %p500 = scmp.eq.s32.totalorder %s36, 0
      %p501 = por %p499, %p500
      %p502 = scmp.ne.s32.totalorder %s488, %s489
      %p503 = scmp.eq.s32.totalorder %s37, 3
      %p504 = por %p502, %p503
      %p506 = scmp.ne.s32.totalorder %s489, %s505
      %p507 = scmp.eq.s32.totalorder %s37, 0
      %p508 = por %p506, %p507
      %s509 = ssub.s32 %s38, %s50
      %p510 = scmp.eq.s32.totalorder %s509, 0
      %s512 = sadd.s32 %s511, 1
      %s513 = scalar_select %p510, %s511, %s512
      %p516 = pneg %p510
      %p517 = scmp.eq.s32.totalorder %s31, 3
      %p518 = por %p516, %p517
      %p519 = scmp.ne.s32.totalorder %s511, %s514
      %p520 = scmp.eq.s32.totalorder %s31, 0
      %p521 = por %p519, %p520
      %p522 = scmp.ne.s32.totalorder %s511, %s514
      %p523 = scmp.eq.s32.totalorder %s36, 3
      %p524 = por %p522, %p523
      %p525 = scmp.ne.s32.totalorder %s514, %s515
      %p526 = scmp.eq.s32.totalorder %s36, 0
      %p527 = por %p525, %p526
      %p528 = scmp.ne.s32.totalorder %s514, %s515
      %p529 = scmp.eq.s32.totalorder %s37, 3
      %p530 = por %p528, %p529
      %p532 = scmp.ne.s32.totalorder %s515, %s531
      %p533 = scmp.eq.s32.totalorder %s37, 0
      %p534 = por %p532, %p533
      %p535 = scmp.le.s32.totalorder 1, %s31
      %p536 = scmp.lt.s32.totalorder %s31, 5
      %p537 = pnand %p535, %p536
      %p538 = pneg %p537
      // Predicated region
      $region9: #{multitask_forward.1} parent=5 // pred_check
        _
      $region10: #{multitask_forward.1} parent=5 // pred_check_branch
        %540 = sbr.rel (%p537) target = $region12
      $region11: #{multitask_forward.1} parent=5 // pred_region
        %s541 = ssub.s32 %s31, 1
        // Predicated region
        $region13: #{multitask_forward.1} parent=11 // pred_check
          %p542 = pneg %p116
        $region14: #{multitask_forward.1} parent=11 // pred_check_branch
          %544 = sbr.rel (%p542) target = $region16
        $region15: #{multitask_forward.1} parent=11 // pred_region
          _
        $region16: #{multitask_forward.1} parent=11 // pred_fallthru
          _
        // Predicated region
        $region17: #{multitask_forward.1} parent=11 // pred_check
          %p545 = pneg %p137
        $region18: #{multitask_forward.1} parent=11 // pred_check_branch
          %547 = sbr.rel (%p545) target = $region20
        $region19: #{multitask_forward.1} parent=11 // pred_region
          _
        $region20: #{multitask_forward.1} parent=11 // pred_fallthru
          _
        // Predicated region
        $region21: #{multitask_forward.1} parent=11 // pred_check
          %p548 = pneg %p158
        $region22: #{multitask_forward.1} parent=11 // pred_check_branch
          %550 = sbr.rel (%p548) target = $region24
        $region23: #{multitask_forward.1} parent=11 // pred_region
          _
        $region24: #{multitask_forward.1} parent=11 // pred_fallthru
          _
        // Predicated region
        $region25: #{multitask_forward.1} parent=11 // pred_check
          %p551 = pneg %p179
        $region26: #{multitask_forward.1} parent=11 // pred_check_branch
          %553 = sbr.rel (%p551) target = $region28
        $region27: #{multitask_forward.1} parent=11 // pred_region
          _
        $region28: #{multitask_forward.1} parent=11 // pred_fallthru
          _
        // Predicated region
        $region29: #{multitask_forward.1} parent=11 // pred_check
          %p554 = pneg %p200
        $region30: #{multitask_forward.1} parent=11 // pred_check_branch
          %556 = sbr.rel (%p554) target = $region32
        $region31: #{multitask_forward.1} parent=11 // pred_region
          _
        $region32: #{multitask_forward.1} parent=11 // pred_fallthru
          _
        // Predicated region
        $region33: #{multitask_forward.1} parent=11 // pred_check
          %p557 = pneg %p221
        $region34: #{multitask_forward.1} parent=11 // pred_check_branch
          %559 = sbr.rel (%p557) target = $region36
        $region35: #{multitask_forward.1} parent=11 // pred_region
          _
        $region36: #{multitask_forward.1} parent=11 // pred_fallthru
          _
        // Predicated region
        $region37: #{multitask_forward.1} parent=11 // pred_check
          %p560 = pneg %p242
        $region38: #{multitask_forward.1} parent=11 // pred_check_branch
          %562 = sbr.rel (%p560) target = $region40
        $region39: #{multitask_forward.1} parent=11 // pred_region
          _
        $region40: #{multitask_forward.1} parent=11 // pred_fallthru
          _
        // Predicated region
        $region41: #{multitask_forward.1} parent=11 // pred_check
          %p563 = pneg %p263
        $region42: #{multitask_forward.1} parent=11 // pred_check_branch
          %565 = sbr.rel (%p563) target = $region44
        $region43: #{multitask_forward.1} parent=11 // pred_region
          _
        $region44: #{multitask_forward.1} parent=11 // pred_fallthru
          _
        // Predicated region
        $region45: #{multitask_forward.1} parent=11 // pred_check
          %p566 = pneg %p284
        $region46: #{multitask_forward.1} parent=11 // pred_check_branch
          %568 = sbr.rel (%p566) target = $region48
        $region47: #{multitask_forward.1} parent=11 // pred_region
          _
        $region48: #{multitask_forward.1} parent=11 // pred_fallthru
          _
        // Predicated region
        $region49: #{multitask_forward.1} parent=11 // pred_check
          %p569 = pneg %p305
        $region50: #{multitask_forward.1} parent=11 // pred_check_branch
          %571 = sbr.rel (%p569) target = $region52
        $region51: #{multitask_forward.1} parent=11 // pred_region
          _
        $region52: #{multitask_forward.1} parent=11 // pred_fallthru
          _
        // Predicated region
        $region53: #{multitask_forward.1} parent=11 // pred_check
          %p572 = pneg %p326
        $region54: #{multitask_forward.1} parent=11 // pred_check_branch
          %574 = sbr.rel (%p572) target = $region56
        $region55: #{multitask_forward.1} parent=11 // pred_region
          _
        $region56: #{multitask_forward.1} parent=11 // pred_fallthru
          _
        // Predicated region
        $region57: #{multitask_forward.1} parent=11 // pred_check
          %p575 = pneg %p347
        $region58: #{multitask_forward.1} parent=11 // pred_check_branch
          %577 = sbr.rel (%p575) target = $region60
        $region59: #{multitask_forward.1} parent=11 // pred_region
          _
        $region60: #{multitask_forward.1} parent=11 // pred_fallthru
          _
        // Predicated region
        $region61: #{multitask_forward.1} parent=11 // pred_check
          %p578 = pneg %p368
        $region62: #{multitask_forward.1} parent=11 // pred_check_branch
          %580 = sbr.rel (%p578) target = $region64
        $region63: #{multitask_forward.1} parent=11 // pred_region
          _
        $region64: #{multitask_forward.1} parent=11 // pred_fallthru
          _
        // Predicated region
        $region65: #{multitask_forward.1} parent=11 // pred_check
          %p581 = pneg %p389
        $region66: #{multitask_forward.1} parent=11 // pred_check_branch
          %583 = sbr.rel (%p581) target = $region68
        $region67: #{multitask_forward.1} parent=11 // pred_region
          _
        $region68: #{multitask_forward.1} parent=11 // pred_fallthru
          _
        // Predicated region
        $region69: #{multitask_forward.1} parent=11 // pred_check
          %p584 = pneg %p410
        $region70: #{multitask_forward.1} parent=11 // pred_check_branch
          %586 = sbr.rel (%p584) target = $region72
        $region71: #{multitask_forward.1} parent=11 // pred_region
          _
        $region72: #{multitask_forward.1} parent=11 // pred_fallthru
          _
        // Predicated region
        $region73: #{multitask_forward.1} parent=11 // pred_check
          %p587 = pneg %p431
        $region74: #{multitask_forward.1} parent=11 // pred_check_branch
          %589 = sbr.rel (%p587) target = $region76
        $region75: #{multitask_forward.1} parent=11 // pred_region
          _
        $region76: #{multitask_forward.1} parent=11 // pred_fallthru
          _
        // Predicated region
        $region77: #{multitask_forward.1} parent=11 // pred_check
          %p590 = pneg %p452
        $region78: #{multitask_forward.1} parent=11 // pred_check_branch
          %592 = sbr.rel (%p590) target = $region80
        $region79: #{multitask_forward.1} parent=11 // pred_region
          _
        $region80: #{multitask_forward.1} parent=11 // pred_fallthru
          _
        // Predicated region
        $region81: #{multitask_forward.1} parent=11 // pred_check
          %p593 = pneg %p473
        $region82: #{multitask_forward.1} parent=11 // pred_check_branch
          %595 = sbr.rel (%p593) target = $region84
        $region83: #{multitask_forward.1} parent=11 // pred_region
          _
        $region84: #{multitask_forward.1} parent=11 // pred_fallthru
          _
      $region12: #{multitask_forward.1} parent=5 // pred_fallthru
        _
      %p596 = scmp.lt.s32.totalorder %s31, 4
      // Predicated region
      $region85: #{multitask_forward.1} parent=5 // pred_check
        %p597 = pneg %p596
      $region86: #{multitask_forward.1} parent=5 // pred_check_branch
        %599 = sbr.rel (%p597) target = $region88
      $region87: #{multitask_forward.1} parent=5 // pred_region
        // Predicated region
        $region89: #{multitask_forward.1} parent=87 // pred_check
          %p600 = pneg %p63
        $region90: #{multitask_forward.1} parent=87 // pred_check_branch
          %602 = sbr.rel (%p600) target = $region92
        $region91: #{multitask_forward.1} parent=87 // pred_region
          %p603 = scmp.lt.s32.totalorder %s38, 1
          %s604 = scalar_select %p603, %s38, 1
          %s605 = smul.addr %s604, 16
          %s606 = smul.addr %s605, 4
          %s607 = scalar_lea.vmem %s0, %s606
        $region92: #{multitask_forward.1} parent=87 // pred_fallthru
          _
        // Predicated region
        $region93: #{multitask_forward.1} parent=87 // pred_check
          %p608 = pneg %p89
        $region94: #{multitask_forward.1} parent=87 // pred_check_branch
          %610 = sbr.rel (%p608) target = $region96
        $region95: #{multitask_forward.1} parent=87 // pred_region
          %p611 = scmp.lt.s32.totalorder %s38, 1
          %s612 = scalar_select %p611, %s38, 1
          %s613 = scalar_lea.vmem %s1, %s612
        $region96: #{multitask_forward.1} parent=87 // pred_fallthru
          _
      $region88: #{multitask_forward.1} parent=5 // pred_fallthru
        _
      %p614 = scmp.le.s32.totalorder 1, %s31
      %p615 = scmp.lt.s32.totalorder %s31, 5
      %p616 = pnand %p614, %p615
      %p617 = pneg %p616
      // Predicated region
      $region97: #{multitask_forward.1} parent=5 // pred_check
        _
      $region98: #{multitask_forward.1} parent=5 // pred_check_branch
        %619 = sbr.rel (%p616) target = $region100
      $region99: #{multitask_forward.1} parent=5 // pred_region
        %s620 = ssub.s32 %s31, 1
        %p621 = scmp.lt.s32.totalorder %s40, 1
        %s622 = scalar_select %p621, %s40, 1
        %s623 = smul.addr %s622, 16
        %s624 = smul.addr %s623, 4
        %s625 = scalar_lea.vmem %s0, %s624
        %p626 = pneg %p69
        %p627 = pneg %p66
        %p628 = scmp.lt.s32.totalorder %s40, 1
        %s629 = scalar_select %p628, %s40, 1
        %s630 = scalar_lea.vmem %s1, %s629
        %p631 = pneg %p95
        %p632 = pneg %p92
        %p633 = pneg %p116
        %p634 = pneg %p113
        %p635 = pneg %p137
        %p636 = pneg %p134
        %p637 = pneg %p158
        %p638 = pneg %p155
        %p639 = pneg %p179
        %p640 = pneg %p176
        %p641 = pneg %p200
        %p642 = pneg %p197
        %p643 = pneg %p221
        %p644 = pneg %p218
        %p645 = pneg %p242
        %p646 = pneg %p239
        %p647 = pneg %p263
        %p648 = pneg %p260
        %p649 = pneg %p284
        %p650 = pneg %p281
        %p651 = pneg %p305
        %p652 = pneg %p302
        %p653 = pneg %p326
        %p654 = pneg %p323
        %p655 = pneg %p347
        %p656 = pneg %p344
        %p657 = pneg %p368
        %p658 = pneg %p365
        %p659 = pneg %p389
        %p660 = pneg %p386
        %p661 = pneg %p410
        %p662 = pneg %p407
        %p663 = pneg %p431
        %p664 = pneg %p428
        %p665 = pneg %p452
        %p666 = pneg %p449
        %p667 = pneg %p473
        %p668 = pneg %p470
        %p669 = pneg %p501
        %p670 = pneg %p498
        %s671 = sand.u32 %s488, 1
        %s672 = scalar_lea.sflag [#allocation5], %s671
        %s673 = sand.u32 %s488, 1
        %s674 = smul.addr %s673, 64
        %s675 = scalar_lea.vmem [#allocation4], %s674
        %p676 = pneg %p527
        %p677 = pneg %p524
        %p678 = scmp.lt.s32.totalorder %s40, 1
        %s679 = scalar_select %p678, %s40, 1
        %s680 = smul.addr %s679, 8
        %s681 = scalar_lea.vmem %s21, %s680
        %p682 = scmp.lt.s32.totalorder %s40, 1
        %s683 = scalar_select %p682, %s40, 1
        %s684 = smul.addr %s683, 16
        %s685 = smul.addr %s684, 4
        %s686 = scalar_lea.vmem %s0, %s685
        %p687 = scmp.lt.s32.totalorder %s40, 1
        %s688 = scalar_select %p687, %s40, 1
        %s689 = scalar_lea.vmem %s1, %s688
        %s690 = smul.u32 8, %s41
        %p691 = scmp.lt.s32.totalorder %s40, 1
        %s692 = scalar_select %p691, %s40, 1
        %s693 = smul.addr %s692, 8
        %s694 = scalar_lea.vmem %s21, %s693
        %p696 = scmp.eq.s32.totalorder %s41, 0
        // Predicated region
        $region101: #{multitask_forward.1} parent=99 // pred_check
          %p697 = pneg %p696
        $region102: #{multitask_forward.1} parent=99 // pred_check_branch
          %699 = sbr.rel (%p697) target = $region104
        $region103: #{multitask_forward.1} parent=99 // pred_region
          %v700 = vld [vmem:[%s686] sm:$0xf]
          %v701 = vld [vmem:[%s686 + $0x4] sm:$0xf]
          %v702 = vld [vmem:[%s686 + $0x8] sm:$0xf]
          %v703 = vld [vmem:[%s686 + $0xc] sm:$0xf]
          %v704 = vld [vmem:[%s686 + $0x10] sm:$0xf]
          %v705 = vld [vmem:[%s686 + $0x14] sm:$0xf]
          %v706 = vld [vmem:[%s686 + $0x18] sm:$0xf]
          %v707 = vld [vmem:[%s686 + $0x1c] sm:$0xf]
          %v708 = vld [vmem:[%s686 + $0x20] sm:$0xf]
          %v709 = vld [vmem:[%s686 + $0x24] sm:$0xf]
          %v710 = vld [vmem:[%s686 + $0x28] sm:$0xf]
          %v711 = vld [vmem:[%s686 + $0x2c] sm:$0xf]
          %v712 = vld [vmem:[%s686 + $0x30] sm:$0xf]
          %v713 = vld [vmem:[%s686 + $0x34] sm:$0xf]
          %v714 = vld [vmem:[%s686 + $0x38] sm:$0xf]
          %v715 = vld [vmem:[%s686 + $0x3c] sm:$0xf]
          %v716 = vld [vmem:[%s4] sm:$0xf]
          %v717 = vld [vmem:[%s4 + $0x4] sm:$0xf]
          %v718 = vld [vmem:[%s4 + $0x8] sm:$0xf]
          %v719 = vld [vmem:[%s4 + $0xc] sm:$0xf]
          %v720 = vld [vmem:[%s4 + $0x10] sm:$0xf]
          %v721 = vld [vmem:[%s4 + $0x14] sm:$0xf]
          %v722 = vld [vmem:[%s4 + $0x18] sm:$0xf]
          %v723 = vld [vmem:[%s4 + $0x1c] sm:$0xf]
          %v724 = vld [vmem:[%s4 + $0x20] sm:$0xf]
          %v725 = vld [vmem:[%s4 + $0x24] sm:$0xf]
          %v726 = vld [vmem:[%s4 + $0x28] sm:$0xf]
          %v727 = vld [vmem:[%s4 + $0x2c] sm:$0xf]
          %v728 = vld [vmem:[%s4 + $0x30] sm:$0xf]
          %v729 = vld [vmem:[%s4 + $0x34] sm:$0xf]
          %v730 = vld [vmem:[%s4 + $0x38] sm:$0xf]
          %v731 = vld [vmem:[%s4 + $0x3c] sm:$0xf]
          %v732 = vld [vmem:[%s5] sm:$0x1]
          %v734 = vlaneseq
          %v735 = vshrl.u32 %v734, 7
          %v736 = vsub.s32 0, %v735
          %v737 = vrot.slane %v732, %v736
          %v755 = vunpack.c.l.b16 %v700
          %v756 = vunpack.c.l.b16 %v701
          %v757 = vunpack.c.l.b16 %v702
          %v758 = vunpack.c.l.b16 %v703
          %v759 = vunpack.c.l.b16 %v704
          %v760 = vunpack.c.l.b16 %v705
          %v761 = vunpack.c.l.b16 %v706
          %v762 = vunpack.c.l.b16 %v707
          %v763 = vunpack.c.l.b16 %v708
          %v764 = vunpack.c.l.b16 %v709
          %v765 = vunpack.c.l.b16 %v710
          %v766 = vunpack.c.l.b16 %v711
          %v767 = vunpack.c.l.b16 %v712
          %v768 = vunpack.c.l.b16 %v713
          %v769 = vunpack.c.l.b16 %v714
          %v770 = vunpack.c.l.b16 %v715
          %v771 = vpack.c.b16 %v756, %v755
          %v772 = vpack.c.b16 %v758, %v757
          %v773 = vpack.c.b16 %v760, %v759
          %v774 = vpack.c.b16 %v762, %v761
          %v775 = vpack.c.b16 %v764, %v763
          %v776 = vpack.c.b16 %v766, %v765
          %v777 = vpack.c.b16 %v768, %v767
          %v778 = vpack.c.b16 %v770, %v769
          %v803 = vunpack.c.l.b16 %v716
          %v804 = vunpack.c.l.b16 %v717
          %v805 = vunpack.c.l.b16 %v718
          %v806 = vunpack.c.l.b16 %v719
          %v807 = vunpack.c.l.b16 %v720
          %v808 = vunpack.c.l.b16 %v721
          %v809 = vunpack.c.l.b16 %v722
          %v810 = vunpack.c.l.b16 %v723
          %v811 = vunpack.c.l.b16 %v724
          %v812 = vunpack.c.l.b16 %v725
          %v813 = vunpack.c.l.b16 %v726
          %v814 = vunpack.c.l.b16 %v727
          %v815 = vunpack.c.l.b16 %v728
          %v816 = vunpack.c.l.b16 %v729
          %v817 = vunpack.c.l.b16 %v730
          %v818 = vunpack.c.l.b16 %v731
          %v819 = vpack.c.b16 %v804, %v803
          %v820 = vpack.c.b16 %v806, %v805
          %v821 = vpack.c.b16 %v808, %v807
          %v822 = vpack.c.b16 %v810, %v809
          %v823 = vpack.c.b16 %v812, %v811
          %v824 = vpack.c.b16 %v814, %v813
          %v825 = vpack.c.b16 %v816, %v815
          %v826 = vpack.c.b16 %v818, %v817
          %835 = vmatprep.subr.bf16.mxu0 0
          %836 = vmatpush1.bf16.msra.mxu0 %v819
          %837 = vmatprep.subr.bf16.mxu0 0
          %838 = vmatpush1.bf16.msra.mxu0 %v820
          %839 = vmatprep.subr.bf16.mxu0 0
          %840 = vmatpush1.bf16.msra.mxu0 %v821
          %841 = vmatprep.subr.bf16.mxu0 0
          %842 = vmatpush1.bf16.msra.mxu0 %v822
          %843 = vmatprep.subr.bf16.mxu0 0
          %844 = vmatpush1.bf16.msra.mxu0 %v823
          %845 = vmatprep.subr.bf16.mxu0 0
          %846 = vmatpush1.bf16.msra.mxu0 %v824
          %847 = vmatprep.subr.bf16.mxu0 0
          %848 = vmatpush1.bf16.msra.mxu0 %v825
          %849 = vmatprep.subr.bf16.mxu0 0
          %850 = vmatpush1.bf16.msra.mxu0 %v826
          %851 = vmatprep.subr.bf16.mxu0 0
          %852 = vmatpush1.bf16.msra.mxu0 0
          %853 = vmatprep.subr.bf16.mxu0 0
          %854 = vmatpush1.bf16.msra.mxu0 0
          %855 = vmatprep.subr.bf16.mxu0 0
          %856 = vmatpush1.bf16.msra.mxu0 0
          %857 = vmatprep.subr.bf16.mxu0 0
          %858 = vmatpush1.bf16.msra.mxu0 0
          %859 = vmatprep.subr.bf16.mxu0 0
          %860 = vmatpush1.bf16.msra.mxu0 0
          %861 = vmatprep.subr.bf16.mxu0 0
          %862 = vmatpush1.bf16.msra.mxu0 0
          %863 = vmatprep.subr.bf16.mxu0 0
          %864 = vmatpush1.bf16.msra.mxu0 0
          %865 = vmatprep.subr.bf16.mxu0 0
          %866 = vmatpush1.bf16.msra.mxu0 0
          %867 = vmatprep.mubr.bf16.mxu0 0
          %868 = vmatmul.mubr.bf16.gmra.mrb[0].mxu0 %v771
          %v869 = vpop.f32.mrb[0].mxu0
          %v870 = vadd.f32 %v737, %v869
          %v871 = vpop.f32.mrb[0].mxu0
          %v872 = vpop.f32.mrb[0].mxu0
          %v873 = vadd.f32 %v737, %v872
          %v874 = vpop.f32.mrb[0].mxu0
          %875 = vmatprep.mubr.bf16.mxu0 0
          %876 = vmatmul.mubr.bf16.gmra.mrb[0].mxu0 %v772
          %v877 = vpop.f32.mrb[0].mxu0
          %v878 = vadd.f32 %v737, %v877
          %v879 = vpop.f32.mrb[0].mxu0
          %v880 = vpop.f32.mrb[0].mxu0
          %v881 = vadd.f32 %v737, %v880
          %v882 = vpop.f32.mrb[0].mxu0
          %883 = vmatprep.mubr.bf16.mxu0 0
          %884 = vmatmul.mubr.bf16.gmra.mrb[0].mxu0 %v773
          %v885 = vpop.f32.mrb[0].mxu0
          %v886 = vadd.f32 %v737, %v885
          %v887 = vpop.f32.mrb[0].mxu0
          %v888 = vpop.f32.mrb[0].mxu0
          %v889 = vadd.f32 %v737, %v888
          %v890 = vpop.f32.mrb[0].mxu0
          %891 = vmatprep.mubr.bf16.mxu0 0
          %892 = vmatmul.mubr.bf16.gmra.mrb[0].mxu0 %v774
          %v893 = vpop.f32.mrb[0].mxu0
          %v894 = vadd.f32 %v737, %v893
          %v895 = vpop.f32.mrb[0].mxu0
          %v896 = vpop.f32.mrb[0].mxu0
          %v897 = vadd.f32 %v737, %v896
          %v898 = vpop.f32.mrb[0].mxu0
          %899 = vmatprep.mubr.bf16.mxu0 0
          %900 = vmatmul.mubr.bf16.gmra.mrb[0].mxu0 %v775
          %v901 = vpop.f32.mrb[0].mxu0
          %v902 = vadd.f32 %v737, %v901
          %v903 = vpop.f32.mrb[0].mxu0
          %v904 = vpop.f32.mrb[0].mxu0
          %v905 = vadd.f32 %v737, %v904
          %v906 = vpop.f32.mrb[0].mxu0
          %907 = vmatprep.mubr.bf16.mxu0 0
          %908 = vmatmul.mubr.bf16.gmra.mrb[0].mxu0 %v776
          %v909 = vpop.f32.mrb[0].mxu0
          %v910 = vadd.f32 %v737, %v909
          %v911 = vpop.f32.mrb[0].mxu0
          %v912 = vpop.f32.mrb[0].mxu0
          %v913 = vadd.f32 %v737, %v912
          %v914 = vpop.f32.mrb[0].mxu0
          %915 = vmatprep.mubr.bf16.mxu0 0
          %916 = vmatmul.mubr.bf16.gmra.mrb[0].mxu0 %v777
          %v917 = vpop.f32.mrb[0].mxu0
          %v918 = vadd.f32 %v737, %v917
          %v919 = vpop.f32.mrb[0].mxu0
          %v920 = vpop.f32.mrb[0].mxu0
          %v921 = vadd.f32 %v737, %v920
          %v922 = vpop.f32.mrb[0].mxu0
          %923 = vmatprep.mubr.bf16.mxu0 0
          %924 = vmatmul.mubr.bf16.gmra.mrb[0].mxu0 %v778
          %v925 = vpop.f32.mrb[0].mxu0
          %v926 = vadd.f32 %v737, %v925
          %v927 = vpop.f32.mrb[0].mxu0
          %v928 = vpop.f32.mrb[0].mxu0
          %v929 = vadd.f32 %v737, %v928
          %v930 = vpop.f32.mrb[0].mxu0
          %931 = vdwg.mxu0
          %v932 = vld [vmem:[%s6] sm:$0xf]
          %v933 = vld [vmem:[%s6 + $0x4] sm:$0xf]
          %v934 = vld [vmem:[%s6 + $0x8] sm:$0xf]
          %v935 = vld [vmem:[%s6 + $0xc] sm:$0xf]
          %v936 = vld [vmem:[%s6 + $0x10] sm:$0xf]
          %v937 = vld [vmem:[%s6 + $0x14] sm:$0xf]
          %v938 = vld [vmem:[%s6 + $0x18] sm:$0xf]
          %v939 = vld [vmem:[%s6 + $0x1c] sm:$0xf]
          %v940 = vld [vmem:[%s6 + $0x20] sm:$0xf]
          %v941 = vld [vmem:[%s6 + $0x24] sm:$0xf]
          %v942 = vld [vmem:[%s6 + $0x28] sm:$0xf]
          %v943 = vld [vmem:[%s6 + $0x2c] sm:$0xf]
          %v944 = vld [vmem:[%s6 + $0x30] sm:$0xf]
          %v945 = vld [vmem:[%s6 + $0x34] sm:$0xf]
          %v946 = vld [vmem:[%s6 + $0x38] sm:$0xf]
          %v947 = vld [vmem:[%s6 + $0x3c] sm:$0xf]
          %v948 = vld [vmem:[%s7] sm:$0x1]
          %v950 = vlaneseq
          %v951 = vshrl.u32 %v950, 7
          %v952 = vsub.s32 0, %v951
          %v953 = vrot.slane %v948, %v952
          %v971 = vunpack.c.l.b16 %v932
          %v972 = vunpack.c.l.b16 %v933
          %v973 = vunpack.c.l.b16 %v934
          %v974 = vunpack.c.l.b16 %v935
          %v975 = vunpack.c.l.b16 %v936
          %v976 = vunpack.c.l.b16 %v937
          %v977 = vunpack.c.l.b16 %v938
          %v978 = vunpack.c.l.b16 %v939
          %v979 = vunpack.c.l.b16 %v940
          %v980 = vunpack.c.l.b16 %v941
          %v981 = vunpack.c.l.b16 %v942
          %v982 = vunpack.c.l.b16 %v943
          %v983 = vunpack.c.l.b16 %v944
          %v984 = vunpack.c.l.b16 %v945
          %v985 = vunpack.c.l.b16 %v946
          %v986 = vunpack.c.l.b16 %v947
          %v987 = vpack.c.b16 %v972, %v971
          %v988 = vpack.c.b16 %v974, %v973
          %v989 = vpack.c.b16 %v976, %v975
          %v990 = vpack.c.b16 %v978, %v977
          %v991 = vpack.c.b16 %v980, %v979
          %v992 = vpack.c.b16 %v982, %v981
          %v993 = vpack.c.b16 %v984, %v983
          %v994 = vpack.c.b16 %v986, %v985
          %1003 = vmatprep.subr.bf16.mxu0 0
          %1004 = vmatpush1.bf16.msra.mxu0 %v987
          %1005 = vmatprep.subr.bf16.mxu0 0
          %1006 = vmatpush1.bf16.msra.mxu0 %v988
          %1007 = vmatprep.subr.bf16.mxu0 0
          %1008 = vmatpush1.bf16.msra.mxu0 %v989
          %1009 = vmatprep.subr.bf16.mxu0 0
          %1010 = vmatpush1.bf16.msra.mxu0 %v990
          %1011 = vmatprep.subr.bf16.mxu0 0
          %1012 = vmatpush1.bf16.msra.mxu0 %v991
          %1013 = vmatprep.subr.bf16.mxu0 0
          %1014 = vmatpush1.bf16.msra.mxu0 %v992
          %1015 = vmatprep.subr.bf16.mxu0 0
          %1016 = vmatpush1.bf16.msra.mxu0 %v993
          %1017 = vmatprep.subr.bf16.mxu0 0
          %1018 = vmatpush1.bf16.msra.mxu0 %v994
          %1019 = vmatprep.subr.bf16.mxu0 0
          %1020 = vmatpush1.bf16.msra.mxu0 0
          %1021 = vmatprep.subr.bf16.mxu0 0
          %1022 = vmatpush1.bf16.msra.mxu0 0
          %1023 = vmatprep.subr.bf16.mxu0 0
          %1024 = vmatpush1.bf16.msra.mxu0 0
          %1025 = vmatprep.subr.bf16.mxu0 0
          %1026 = vmatpush1.bf16.msra.mxu0 0
          %1027 = vmatprep.subr.bf16.mxu0 0
          %1028 = vmatpush1.bf16.msra.mxu0 0
          %1029 = vmatprep.subr.bf16.mxu0 0
          %1030 = vmatpush1.bf16.msra.mxu0 0
          %1031 = vmatprep.subr.bf16.mxu0 0
          %1032 = vmatpush1.bf16.msra.mxu0 0
          %1033 = vmatprep.subr.bf16.mxu0 0
          %1034 = vmatpush1.bf16.msra.mxu0 0
          %1035 = vmatprep.mubr.bf16.mxu0 0
          %1036 = vmatmul.mubr.bf16.gmra.mrb[0].mxu0 %v771
          %v1037 = vpop.f32.mrb[0].mxu0
          %v1038 = vadd.f32 %v953, %v1037
          %v1039 = vpop.f32.mrb[0].mxu0
          %v1040 = vpop.f32.mrb[0].mxu0
          %v1041 = vadd.f32 %v953, %v1040
          %v1042 = vpop.f32.mrb[0].mxu0
          %1043 = vmatprep.mubr.bf16.mxu0 0
          %1044 = vmatmul.mubr.bf16.gmra.mrb[0].mxu0 %v772
          %v1045 = vpop.f32.mrb[0].mxu0
          %v1046 = vadd.f32 %v953, %v1045
          %v1047 = vpop.f32.mrb[0].mxu0
          %v1048 = vpop.f32.mrb[0].mxu0
          %v1049 = vadd.f32 %v953, %v1048
          %v1050 = vpop.f32.mrb[0].mxu0
          %1051 = vmatprep.mubr.bf16.mxu0 0
          %1052 = vmatmul.mubr.bf16.gmra.mrb[0].mxu0 %v773
          %v1053 = vpop.f32.mrb[0].mxu0
          %v1054 = vadd.f32 %v953, %v1053
          %v1055 = vpop.f32.mrb[0].mxu0
          %v1056 = vpop.f32.mrb[0].mxu0
          %v1057 = vadd.f32 %v953, %v1056
          %v1058 = vpop.f32.mrb[0].mxu0
          %1059 = vmatprep.mubr.bf16.mxu0 0
          %1060 = vmatmul.mubr.bf16.gmra.mrb[0].mxu0 %v774
          %v1061 = vpop.f32.mrb[0].mxu0
          %v1062 = vadd.f32 %v953, %v1061
          %v1063 = vpop.f32.mrb[0].mxu0
          %v1064 = vpop.f32.mrb[0].mxu0
          %v1065 = vadd.f32 %v953, %v1064
          %v1066 = vpop.f32.mrb[0].mxu0
          %1067 = vmatprep.mubr.bf16.mxu0 0
          %1068 = vmatmul.mubr.bf16.gmra.mrb[0].mxu0 %v775
          %v1069 = vpop.f32.mrb[0].mxu0
          %v1070 = vadd.f32 %v953, %v1069
          %v1071 = vpop.f32.mrb[0].mxu0
          %v1072 = vpop.f32.mrb[0].mxu0
          %v1073 = vadd.f32 %v953, %v1072
          %v1074 = vpop.f32.mrb[0].mxu0
          %1075 = vmatprep.mubr.bf16.mxu0 0
          %1076 = vmatmul.mubr.bf16.gmra.mrb[0].mxu0 %v776
          %v1077 = vpop.f32.mrb[0].mxu0
          %v1078 = vadd.f32 %v953, %v1077
          %v1079 = vpop.f32.mrb[0].mxu0
          %v1080 = vpop.f32.mrb[0].mxu0
          %v1081 = vadd.f32 %v953, %v1080
          %v1082 = vpop.f32.mrb[0].mxu0
          %1083 = vmatprep.mubr.bf16.mxu0 0
          %1084 = vmatmul.mubr.bf16.gmra.mrb[0].mxu0 %v777
          %v1085 = vpop.f32.mrb[0].mxu0
          %v1086 = vadd.f32 %v953, %v1085
          %v1087 = vpop.f32.mrb[0].mxu0
          %v1088 = vpop.f32.mrb[0].mxu0
          %v1089 = vadd.f32 %v953, %v1088
          %v1090 = vpop.f32.mrb[0].mxu0
          %1091 = vmatprep.mubr.bf16.mxu0 0
          %1092 = vmatmul.mubr.bf16.gmra.mrb[0].mxu0 %v778
          %v1093 = vpop.f32.mrb[0].mxu0
          %v1094 = vadd.f32 %v953, %v1093
          %v1095 = vpop.f32.mrb[0].mxu0
          %v1096 = vpop.f32.mrb[0].mxu0
          %v1097 = vadd.f32 %v953, %v1096
          %v1098 = vpop.f32.mrb[0].mxu0
          %1099 = vdwg.mxu0
          %v1100 = vpack.c.bf16 %v873, %v870
          %v1101 = vpack.c.bf16 %v881, %v878
          %v1102 = vpack.c.bf16 %v889, %v886
          %v1103 = vpack.c.bf16 %v897, %v894
          %v1104 = vpack.c.bf16 %v905, %v902
          %v1105 = vpack.c.bf16 %v913, %v910
          %v1106 = vpack.c.bf16 %v921, %v918
          %v1107 = vpack.c.bf16 %v929, %v926
          %1108 = vst [vmem:[#allocation2] sm:$0xff] %v1100
          %1109 = vst [vmem:[#allocation2 + $0x8] sm:$0xff] %v1101
          %1110 = vst [vmem:[#allocation2 + $0x10] sm:$0xff] %v1102
          %1111 = vst [vmem:[#allocation2 + $0x18] sm:$0xff] %v1103
          %1112 = vst [vmem:[#allocation2 + $0x20] sm:$0xff] %v1104
          %1113 = vst [vmem:[#allocation2 + $0x28] sm:$0xff] %v1105
          %1114 = vst [vmem:[#allocation2 + $0x30] sm:$0xff] %v1106
          %1115 = vst [vmem:[#allocation2 + $0x38] sm:$0xff] %v1107
          %v1116 = vpack.c.bf16 %v1041, %v1038
          %v1117 = vpack.c.bf16 %v1049, %v1046
          %v1118 = vpack.c.bf16 %v1057, %v1054
          %v1119 = vpack.c.bf16 %v1065, %v1062
          %v1120 = vpack.c.bf16 %v1073, %v1070
          %v1121 = vpack.c.bf16 %v1081, %v1078
          %v1122 = vpack.c.bf16 %v1089, %v1086
          %v1123 = vpack.c.bf16 %v1097, %v1094
          %1124 = vst [vmem:[#allocation3] sm:$0xff] %v1116
          %1125 = vst [vmem:[#allocation3 + $0x8] sm:$0xff] %v1117
          %1126 = vst [vmem:[#allocation3 + $0x10] sm:$0xff] %v1118
          %1127 = vst [vmem:[#allocation3 + $0x18] sm:$0xff] %v1119
          %1128 = vst [vmem:[#allocation3 + $0x20] sm:$0xff] %v1120
          %1129 = vst [vmem:[#allocation3 + $0x28] sm:$0xff] %v1121
          %1130 = vst [vmem:[#allocation3 + $0x30] sm:$0xff] %v1122
          %1131 = vst [vmem:[#allocation3 + $0x38] sm:$0xff] %v1123
        $region104: #{multitask_forward.1} parent=99 // pred_fallthru
          _
        %s1132 = smul.u32 %s41, 64
        %s1133 = sshra.s32 %s1132, 3
        %s1134 = sand.u32 %s1132, 7
        %s1135 = smul.addr %s1133, 4
        %s1136 = scalar_lea.vmem %s686, %s1135
        %v1137 = vld [vmem:[%s1136] sm:$0xf]
        %v1138 = vld [vmem:[%s1136 + $0x4] sm:$0xf]
        %v1139 = vld [vmem:[%s1136 + $0x8] sm:$0xf]
        %v1140 = vld [vmem:[%s1136 + $0xc] sm:$0xf]
        %v1141 = vld [vmem:[%s1136 + $0x10] sm:$0xf]
        %v1142 = vld [vmem:[%s1136 + $0x14] sm:$0xf]
        %v1143 = vld [vmem:[%s1136 + $0x18] sm:$0xf]
        %v1144 = vld [vmem:[%s1136 + $0x1c] sm:$0xf]
        %v1145 = vld [vmem:[%s2] sm:$0xf]
        %v1146 = vld [vmem:[%s2 + $0x4] sm:$0xf]
        %v1147 = vld [vmem:[%s2 + $0x8] sm:$0xf]
        %v1148 = vld [vmem:[%s2 + $0xc] sm:$0xf]
        %v1149 = vld [vmem:[%s2 + $0x10] sm:$0xf]
        %v1150 = vld [vmem:[%s2 + $0x14] sm:$0xf]
        %v1151 = vld [vmem:[%s2 + $0x18] sm:$0xf]
        %v1152 = vld [vmem:[%s2 + $0x1c] sm:$0xf]
        %v1153 = vld [vmem:[%s2 + $0x20] sm:$0xf]
        %v1154 = vld [vmem:[%s2 + $0x24] sm:$0xf]
        %v1155 = vld [vmem:[%s2 + $0x28] sm:$0xf]
        %v1156 = vld [vmem:[%s2 + $0x2c] sm:$0xf]
        %v1157 = vld [vmem:[%s2 + $0x30] sm:$0xf]
        %v1158 = vld [vmem:[%s2 + $0x34] sm:$0xf]
        %v1159 = vld [vmem:[%s2 + $0x38] sm:$0xf]
        %v1160 = vld [vmem:[%s2 + $0x3c] sm:$0xf]
        %v1161 = vld [vmem:[%s3] sm:$0x1]
        %v1163 = vlaneseq
        %v1164 = vshrl.u32 %v1163, 7
        %v1165 = vsub.s32 0, %v1164
        %v1166 = vrot.slane %v1161, %v1165
        %v1176 = vunpack.c.l.b16 %v1137
        %v1177 = vunpack.c.l.b16 %v1138
        %v1178 = vunpack.c.l.b16 %v1139
        %v1179 = vunpack.c.l.b16 %v1140
        %v1180 = vunpack.c.l.b16 %v1141
        %v1181 = vunpack.c.l.b16 %v1142
        %v1182 = vunpack.c.l.b16 %v1143
        %v1183 = vunpack.c.l.b16 %v1144
        %v1184 = vpack.c.b16 %v1177, %v1176
        %v1185 = vpack.c.b16 %v1179, %v1178
        %v1186 = vpack.c.b16 %v1181, %v1180
        %v1187 = vpack.c.b16 %v1183, %v1182
        %v1208 = vunpack.c.l.b16 %v1145
        %v1209 = vunpack.c.l.b16 %v1146
        %v1210 = vunpack.c.l.b16 %v1147
        %v1211 = vunpack.c.l.b16 %v1148
        %v1212 = vunpack.c.l.b16 %v1149
        %v1213 = vunpack.c.l.b16 %v1150
        %v1214 = vunpack.c.l.b16 %v1151
        %v1215 = vunpack.c.l.b16 %v1152
        %v1216 = vunpack.c.l.b16 %v1153
        %v1217 = vunpack.c.l.b16 %v1154
        %v1218 = vunpack.c.l.b16 %v1155
        %v1219 = vunpack.c.l.b16 %v1156
        %v1220 = vunpack.c.l.b16 %v1157
        %v1221 = vunpack.c.l.b16 %v1158
        %v1222 = vunpack.c.l.b16 %v1159
        %v1223 = vunpack.c.l.b16 %v1160
        %v1224 = vpack.c.b16 %v1209, %v1208
        %v1225 = vpack.c.b16 %v1211, %v1210
        %v1226 = vpack.c.b16 %v1213, %v1212
        %v1227 = vpack.c.b16 %v1215, %v1214
        %v1228 = vpack.c.b16 %v1217, %v1216
        %v1229 = vpack.c.b16 %v1219, %v1218
        %v1230 = vpack.c.b16 %v1221, %v1220
        %v1231 = vpack.c.b16 %v1223, %v1222
        %1240 = vmatprep.subr.bf16.mxu0 0
        %1241 = vmatpush1.bf16.msra.mxu0 %v1224
        %1242 = vmatprep.subr.bf16.mxu0 0
        %1243 = vmatpush1.bf16.msra.mxu0 %v1225
        %1244 = vmatprep.subr.bf16.mxu0 0
        %1245 = vmatpush1.bf16.msra.mxu0 %v1226
        %1246 = vmatprep.subr.bf16.mxu0 0
        %1247 = vmatpush1.bf16.msra.mxu0 %v1227
        %1248 = vmatprep.subr.bf16.mxu0 0
        %1249 = vmatpush1.bf16.msra.mxu0 %v1228
        %1250 = vmatprep.subr.bf16.mxu0 0
        %1251 = vmatpush1.bf16.msra.mxu0 %v1229
        %1252 = vmatprep.subr.bf16.mxu0 0
        %1253 = vmatpush1.bf16.msra.mxu0 %v1230
        %1254 = vmatprep.subr.bf16.mxu0 0
        %1255 = vmatpush1.bf16.msra.mxu0 %v1231
        %1256 = vmatprep.subr.bf16.mxu0 0
        %1257 = vmatpush1.bf16.msra.mxu0 0
        %1258 = vmatprep.subr.bf16.mxu0 0
        %1259 = vmatpush1.bf16.msra.mxu0 0
        %1260 = vmatprep.subr.bf16.mxu0 0
        %1261 = vmatpush1.bf16.msra.mxu0 0
        %1262 = vmatprep.subr.bf16.mxu0 0
        %1263 = vmatpush1.bf16.msra.mxu0 0
        %1264 = vmatprep.subr.bf16.mxu0 0
        %1265 = vmatpush1.bf16.msra.mxu0 0
        %1266 = vmatprep.subr.bf16.mxu0 0
        %1267 = vmatpush1.bf16.msra.mxu0 0
        %1268 = vmatprep.subr.bf16.mxu0 0
        %1269 = vmatpush1.bf16.msra.mxu0 0
        %1270 = vmatprep.subr.bf16.mxu0 0
        %1271 = vmatpush1.bf16.msra.mxu0 0
        %1272 = vmatprep.mubr.bf16.mxu0 0
        %1273 = vmatmul.mubr.bf16.gmra.mrb[0].mxu0 %v1184
        %v1274 = vpop.f32.mrb[0].mxu0
        %v1275 = vadd.f32 %v1166, %v1274
        %v1276 = vpop.f32.mrb[0].mxu0
        %v1277 = vpop.f32.mrb[0].mxu0
        %v1278 = vadd.f32 %v1166, %v1277
        %v1279 = vpop.f32.mrb[0].mxu0
        %1280 = vmatprep.mubr.bf16.mxu0 0
        %1281 = vmatmul.mubr.bf16.gmra.mrb[0].mxu0 %v1185
        %v1282 = vpop.f32.mrb[0].mxu0
        %v1283 = vadd.f32 %v1166, %v1282
        %v1284 = vpop.f32.mrb[0].mxu0
        %v1285 = vpop.f32.mrb[0].mxu0
        %v1286 = vadd.f32 %v1166, %v1285
        %v1287 = vpop.f32.mrb[0].mxu0
        %1288 = vmatprep.mubr.bf16.mxu0 0
        %1289 = vmatmul.mubr.bf16.gmra.mrb[0].mxu0 %v1186
        %v1290 = vpop.f32.mrb[0].mxu0
        %v1291 = vadd.f32 %v1166, %v1290
        %v1292 = vpop.f32.mrb[0].mxu0
        %v1293 = vpop.f32.mrb[0].mxu0
        %v1294 = vadd.f32 %v1166, %v1293
        %v1295 = vpop.f32.mrb[0].mxu0
        %1296 = vmatprep.mubr.bf16.mxu0 0
        %1297 = vmatmul.mubr.bf16.gmra.mrb[0].mxu0 %v1187
        %v1298 = vpop.f32.mrb[0].mxu0
        %v1299 = vadd.f32 %v1166, %v1298
        %v1300 = vpop.f32.mrb[0].mxu0
        %v1301 = vpop.f32.mrb[0].mxu0
        %v1302 = vadd.f32 %v1166, %v1301
        %v1303 = vpop.f32.mrb[0].mxu0
        %1304 = vdwg.mxu0
        %v1305 = vpack.c.bf16 %v1278, %v1275
        %v1306 = vpack.c.bf16 %v1286, %v1283
        %v1307 = vpack.c.bf16 %v1294, %v1291
        %v1308 = vpack.c.bf16 %v1302, %v1299
        %v1309 = vld [vmem:[#allocation2] sm:$0xff]
        %v1310 = vld [vmem:[#allocation2 + $0x8] sm:$0xff]
        %v1311 = vld [vmem:[#allocation2 + $0x10] sm:$0xff]
        %v1312 = vld [vmem:[#allocation2 + $0x18] sm:$0xff]
        %v1313 = vld [vmem:[#allocation2 + $0x20] sm:$0xff]
        %v1314 = vld [vmem:[#allocation2 + $0x28] sm:$0xff]
        %v1315 = vld [vmem:[#allocation2 + $0x30] sm:$0xff]
        %v1316 = vld [vmem:[#allocation2 + $0x38] sm:$0xff]
        %1317 = vmatprep.subr.bf16.mxu0 0
        %1318 = vmatpush1.bf16.xpose.msra.mxu0 %v1309
        %1319 = vmatprep.subr.bf16.mxu0 0
        %1320 = vmatpush1.bf16.xpose.msra.mxu0 %v1310
        %1321 = vmatprep.subr.bf16.mxu0 0
        %1322 = vmatpush1.bf16.xpose.msra.mxu0 %v1311
        %1323 = vmatprep.subr.bf16.mxu0 0
        %1324 = vmatpush1.bf16.xpose.msra.mxu0 %v1312
        %1325 = vmatprep.subr.bf16.mxu0 0
        %1326 = vmatpush1.bf16.xpose.msra.mxu0 %v1313
        %1327 = vmatprep.subr.bf16.mxu0 0
        %1328 = vmatpush1.bf16.xpose.msra.mxu0 %v1314
        %1329 = vmatprep.subr.bf16.mxu0 0
        %1330 = vmatpush1.bf16.xpose.msra.mxu0 %v1315
        %1331 = vmatprep.subr.bf16.mxu0 0
        %1332 = vmatpush1.bf16.xpose.msra.mxu0 %v1316
        %1333 = vmatprep.subr.bf16.mxu0 0
        %1334 = vmatpush1.bf16.xpose.msra.mxu0 0
        %1335 = vmatprep.subr.bf16.mxu0 0
        %1336 = vmatpush1.bf16.xpose.msra.mxu0 0
        %1337 = vmatprep.subr.bf16.mxu0 0
        %1338 = vmatpush1.bf16.xpose.msra.mxu0 0
        %1339 = vmatprep.subr.bf16.mxu0 0
        %1340 = vmatpush1.bf16.xpose.msra.mxu0 0
        %1341 = vmatprep.subr.bf16.mxu0 0
        %1342 = vmatpush1.bf16.xpose.msra.mxu0 0
        %1343 = vmatprep.subr.bf16.mxu0 0
        %1344 = vmatpush1.bf16.xpose.msra.mxu0 0
        %1345 = vmatprep.subr.bf16.mxu0 0
        %1346 = vmatpush1.bf16.xpose.msra.mxu0 0
        %1347 = vmatprep.subr.bf16.mxu0 0
        %1348 = vmatpush1.bf16.xpose.msra.mxu0 0
        %1349 = vmatprep.mubr.bf16.mxu0 0
        %1350 = vmatmul.mubr.bf16.gmra.mrb[0].mxu0 %v1305
        %v1351 = vpop.f32.mrb[0].mxu0
        %v1352 = vadd.f32 0.0, %v1351
        %v1353 = vpop.f32.mrb[0].mxu0
        %v1354 = vpop.f32.mrb[0].mxu0
        %v1355 = vadd.f32 0.0, %v1354
        %v1356 = vpop.f32.mrb[0].mxu0
        %1357 = vmatprep.mubr.bf16.mxu0 0
        %1358 = vmatmul.mubr.bf16.gmra.mrb[0].mxu0 %v1306
        %v1359 = vpop.f32.mrb[0].mxu0
        %v1360 = vadd.f32 0.0, %v1359
        %v1361 = vpop.f32.mrb[0].mxu0
        %v1362 = vpop.f32.mrb[0].mxu0
        %v1363 = vadd.f32 0.0, %v1362
        %v1364 = vpop.f32.mrb[0].mxu0
        %1365 = vmatprep.mubr.bf16.mxu0 0
        %1366 = vmatmul.mubr.bf16.gmra.mrb[0].mxu0 %v1307
        %v1367 = vpop.f32.mrb[0].mxu0
        %v1368 = vadd.f32 0.0, %v1367
        %v1369 = vpop.f32.mrb[0].mxu0
        %v1370 = vpop.f32.mrb[0].mxu0
        %v1371 = vadd.f32 0.0, %v1370
        %v1372 = vpop.f32.mrb[0].mxu0
        %1373 = vmatprep.mubr.bf16.mxu0 0
        %1374 = vmatmul.mubr.bf16.gmra.mrb[0].mxu0 %v1308
        %v1375 = vpop.f32.mrb[0].mxu0
        %v1376 = vadd.f32 0.0, %v1375
        %v1377 = vpop.f32.mrb[0].mxu0
        %v1378 = vpop.f32.mrb[0].mxu0
        %v1379 = vadd.f32 0.0, %v1378
        %v1380 = vpop.f32.mrb[0].mxu0
        %1381 = vdwg.mxu0
        %v1382 = vmul.f32 %v1352, 0.088388346
        %v1383 = vmul.f32 %v1355, 0.088388346
        %v1384 = vmul.f32 %v1360, 0.088388346
        %v1385 = vmul.f32 %v1363, 0.088388346
        %v1386 = vmul.f32 %v1368, 0.088388346
        %v1387 = vmul.f32 %v1371, 0.088388346
        %v1388 = vmul.f32 %v1376, 0.088388346
        %v1389 = vmul.f32 %v1379, 0.088388346
        %v1390 = vld [vmem:[%s689] sm:$0x1]
        %v1392 = vlaneseq
        %v1393 = vshrl.u32 %v1392, 7
        %v1394 = vsub.s32 0, %v1393
        %v1395 = vrot.slane %v1390, %v1394
        %v1397 = vadd.f32 %v1382, %v1395
        %v1398 = vadd.f32 %v1383, %v1395
        %v1399 = vadd.f32 %v1384, %v1395
        %v1400 = vadd.f32 %v1385, %v1395
        %v1401 = vadd.f32 %v1386, %v1395
        %v1402 = vadd.f32 %v1387, %v1395
        %v1403 = vadd.f32 %v1388, %v1395
        %v1404 = vadd.f32 %v1389, %v1395
        %1405 = vmax.xlane.f32.xlu0 %v1397
        %v1406 = vpop.xlane.xlu0 %1405
        %1407 = vmax.xlane.f32.xlu0 %v1398
        %v1408 = vpop.xlane.xlu0 %1407
        %1409 = vmax.xlane.f32.xlu0 %v1399
        %v1410 = vpop.xlane.xlu0 %1409
        %1411 = vmax.xlane.f32.xlu0 %v1400
        %v1412 = vpop.xlane.xlu0 %1411
        %1413 = vmax.xlane.f32.xlu0 %v1401
        %v1414 = vpop.xlane.xlu0 %1413
        %1415 = vmax.xlane.f32.xlu0 %v1402
        %v1416 = vpop.xlane.xlu0 %1415
        %1417 = vmax.xlane.f32.xlu0 %v1403
        %v1418 = vpop.xlane.xlu0 %1417
        %1419 = vmax.xlane.f32.xlu0 %v1404
        %v1420 = vpop.xlane.xlu0 %1419
        %v1421 = vsub.f32 %v1397, %v1406
        %v1422 = vsub.f32 %v1398, %v1408
        %v1423 = vsub.f32 %v1399, %v1410
        %v1424 = vsub.f32 %v1400, %v1412
        %v1425 = vsub.f32 %v1401, %v1414
        %v1426 = vsub.f32 %v1402, %v1416
        %v1427 = vsub.f32 %v1403, %v1418
        %v1428 = vsub.f32 %v1404, %v1420
        %v1429 = vmul.f32 %v1421, 1.442695
        %v1430 = vpow.pop %v1429
        %v1431 = vmul.f32 %v1422, 1.442695
        %v1432 = vpow.pop %v1431
        %v1433 = vmul.f32 %v1423, 1.442695
        %v1434 = vpow.pop %v1433
        %v1435 = vmul.f32 %v1424, 1.442695
        %v1436 = vpow.pop %v1435
        %v1437 = vmul.f32 %v1425, 1.442695
        %v1438 = vpow.pop %v1437
        %v1439 = vmul.f32 %v1426, 1.442695
        %v1440 = vpow.pop %v1439
        %v1441 = vmul.f32 %v1427, 1.442695
        %v1442 = vpow.pop %v1441
        %v1443 = vmul.f32 %v1428, 1.442695
        %v1444 = vpow.pop %v1443
        %1445 = vadd.xlane.f32.xlu0 %v1430
        %v1446 = vpop.xlane.xlu0 %1445
        %1447 = vadd.xlane.f32.xlu0 %v1432
        %v1448 = vpop.xlane.xlu0 %1447
        %1449 = vadd.xlane.f32.xlu0 %v1434
        %v1450 = vpop.xlane.xlu0 %1449
        %1451 = vadd.xlane.f32.xlu0 %v1436
        %v1452 = vpop.xlane.xlu0 %1451
        %1453 = vadd.xlane.f32.xlu0 %v1438
        %v1454 = vpop.xlane.xlu0 %1453
        %1455 = vadd.xlane.f32.xlu0 %v1440
        %v1456 = vpop.xlane.xlu0 %1455
        %1457 = vadd.xlane.f32.xlu0 %v1442
        %v1458 = vpop.xlane.xlu0 %1457
        %1459 = vadd.xlane.f32.xlu0 %v1444
        %v1460 = vpop.xlane.xlu0 %1459
        %v1461 = vrcp.pop %v1446
        %v1462 = vrcp.pop %v1448
        %v1463 = vrcp.pop %v1450
        %v1464 = vrcp.pop %v1452
        %v1465 = vrcp.pop %v1454
        %v1466 = vrcp.pop %v1456
        %v1467 = vrcp.pop %v1458
        %v1468 = vrcp.pop %v1460
        %v1469 = vmul.f32 %v1430, %v1461
        %v1470 = vmul.f32 %v1432, %v1462
        %v1471 = vmul.f32 %v1434, %v1463
        %v1472 = vmul.f32 %v1436, %v1464
        %v1473 = vmul.f32 %v1438, %v1465
        %v1474 = vmul.f32 %v1440, %v1466
        %v1475 = vmul.f32 %v1442, %v1467
        %v1476 = vmul.f32 %v1444, %v1468
        %v1477 = vpack.c.bf16 %v1470, %v1469
        %v1478 = vpack.c.bf16 %v1472, %v1471
        %v1479 = vpack.c.bf16 %v1474, %v1473
        %v1480 = vpack.c.bf16 %v1476, %v1475
        %v1481 = vld [vmem:[#allocation3] sm:$0xff]
        %v1482 = vld [vmem:[#allocation3 + $0x8] sm:$0xff]
        %v1483 = vld [vmem:[#allocation3 + $0x10] sm:$0xff]
        %v1484 = vld [vmem:[#allocation3 + $0x18] sm:$0xff]
        %v1485 = vld [vmem:[#allocation3 + $0x20] sm:$0xff]
        %v1486 = vld [vmem:[#allocation3 + $0x28] sm:$0xff]
        %v1487 = vld [vmem:[#allocation3 + $0x30] sm:$0xff]
        %v1488 = vld [vmem:[#allocation3 + $0x38] sm:$0xff]
        %1489 = vmatprep.subr.bf16.mxu0 0
        %1490 = vmatpush1.bf16.msra.mxu0 %v1481
        %1491 = vmatprep.subr.bf16.mxu0 0
        %1492 = vmatpush1.bf16.msra.mxu0 %v1482
        %1493 = vmatprep.subr.bf16.mxu0 0
        %1494 = vmatpush1.bf16.msra.mxu0 %v1483
        %1495 = vmatprep.subr.bf16.mxu0 0
        %1496 = vmatpush1.bf16.msra.mxu0 %v1484
        %1497 = vmatprep.subr.bf16.mxu0 0
        %1498 = vmatpush1.bf16.msra.mxu0 %v1485
        %1499 = vmatprep.subr.bf16.mxu0 0
        %1500 = vmatpush1.bf16.msra.mxu0 %v1486
        %1501 = vmatprep.subr.bf16.mxu0 0
        %1502 = vmatpush1.bf16.msra.mxu0 %v1487
        %1503 = vmatprep.subr.bf16.mxu0 0
        %1504 = vmatpush1.bf16.msra.mxu0 %v1488
        %1505 = vmatprep.subr.bf16.mxu0 0
        %1506 = vmatpush1.bf16.msra.mxu0 0
        %1507 = vmatprep.subr.bf16.mxu0 0
        %1508 = vmatpush1.bf16.msra.mxu0 0
        %1509 = vmatprep.subr.bf16.mxu0 0
        %1510 = vmatpush1.bf16.msra.mxu0 0
        %1511 = vmatprep.subr.bf16.mxu0 0
        %1512 = vmatpush1.bf16.msra.mxu0 0
        %1513 = vmatprep.subr.bf16.mxu0 0
        %1514 = vmatpush1.bf16.msra.mxu0 0
        %1515 = vmatprep.subr.bf16.mxu0 0
        %1516 = vmatpush1.bf16.msra.mxu0 0
        %1517 = vmatprep.subr.bf16.mxu0 0
        %1518 = vmatpush1.bf16.msra.mxu0 0
        %1519 = vmatprep.subr.bf16.mxu0 0
        %1520 = vmatpush1.bf16.msra.mxu0 0
        %1521 = vmatprep.mubr.bf16.mxu0 0
        %1522 = vmatmul.mubr.bf16.gmra.mrb[0].mxu0 %v1477
        %v1523 = vpop.f32.mrb[0].mxu0
        %v1524 = vadd.f32 0.0, %v1523
        %v1525 = vpop.f32.mrb[0].mxu0
        %v1526 = vpop.f32.mrb[0].mxu0
        %v1527 = vadd.f32 0.0, %v1526
        %v1528 = vpop.f32.mrb[0].mxu0
        %1529 = vmatprep.mubr.bf16.mxu0 0
        %1530 = vmatmul.mubr.bf16.gmra.mrb[0].mxu0 %v1478
        %v1531 = vpop.f32.mrb[0].mxu0
        %v1532 = vadd.f32 0.0, %v1531
        %v1533 = vpop.f32.mrb[0].mxu0
        %v1534 = vpop.f32.mrb[0].mxu0
        %v1535 = vadd.f32 0.0, %v1534
        %v1536 = vpop.f32.mrb[0].mxu0
        %1537 = vmatprep.mubr.bf16.mxu0 0
        %1538 = vmatmul.mubr.bf16.gmra.mrb[0].mxu0 %v1479
        %v1539 = vpop.f32.mrb[0].mxu0
        %v1540 = vadd.f32 0.0, %v1539
        %v1541 = vpop.f32.mrb[0].mxu0
        %v1542 = vpop.f32.mrb[0].mxu0
        %v1543 = vadd.f32 0.0, %v1542
        %v1544 = vpop.f32.mrb[0].mxu0
        %1545 = vmatprep.mubr.bf16.mxu0 0
        %1546 = vmatmul.mubr.bf16.gmra.mrb[0].mxu0 %v1480
        %v1547 = vpop.f32.mrb[0].mxu0
        %v1548 = vadd.f32 0.0, %v1547
        %v1549 = vpop.f32.mrb[0].mxu0
        %v1550 = vpop.f32.mrb[0].mxu0
        %v1551 = vadd.f32 0.0, %v1550
        %v1552 = vpop.f32.mrb[0].mxu0
        %1553 = vdwg.mxu0
        %v1554 = vpack.c.bf16 %v1527, %v1524
        %v1555 = vpack.c.bf16 %v1535, %v1532
        %v1556 = vpack.c.bf16 %v1543, %v1540
        %v1557 = vpack.c.bf16 %v1551, %v1548
        %v1558 = vld [vmem:[%s8] sm:$0xf]
        %v1559 = vld [vmem:[%s8 + $0x4] sm:$0xf]
        %v1560 = vld [vmem:[%s8 + $0x8] sm:$0xf]
        %v1561 = vld [vmem:[%s8 + $0xc] sm:$0xf]
        %v1562 = vld [vmem:[%s8 + $0x10] sm:$0xf]
        %v1563 = vld [vmem:[%s8 + $0x14] sm:$0xf]
        %v1564 = vld [vmem:[%s8 + $0x18] sm:$0xf]
        %v1565 = vld [vmem:[%s8 + $0x1c] sm:$0xf]
        %v1566 = vld [vmem:[%s8 + $0x20] sm:$0xf]
        %v1567 = vld [vmem:[%s8 + $0x24] sm:$0xf]
        %v1568 = vld [vmem:[%s8 + $0x28] sm:$0xf]
        %v1569 = vld [vmem:[%s8 + $0x2c] sm:$0xf]
        %v1570 = vld [vmem:[%s8 + $0x30] sm:$0xf]
        %v1571 = vld [vmem:[%s8 + $0x34] sm:$0xf]
        %v1572 = vld [vmem:[%s8 + $0x38] sm:$0xf]
        %v1573 = vld [vmem:[%s8 + $0x3c] sm:$0xf]
        %v1574 = vld [vmem:[%s9] sm:$0x1]
        %v1576 = vlaneseq
        %v1577 = vshrl.u32 %v1576, 7
        %v1578 = vsub.s32 0, %v1577
        %v1579 = vrot.slane %v1574, %v1578
        %v1597 = vunpack.c.l.b16 %v1558
        %v1598 = vunpack.c.l.b16 %v1559
        %v1599 = vunpack.c.l.b16 %v1560
        %v1600 = vunpack.c.l.b16 %v1561
        %v1601 = vunpack.c.l.b16 %v1562
        %v1602 = vunpack.c.l.b16 %v1563
        %v1603 = vunpack.c.l.b16 %v1564
        %v1604 = vunpack.c.l.b16 %v1565
        %v1605 = vunpack.c.l.b16 %v1566
        %v1606 = vunpack.c.l.b16 %v1567
        %v1607 = vunpack.c.l.b16 %v1568
        %v1608 = vunpack.c.l.b16 %v1569
        %v1609 = vunpack.c.l.b16 %v1570
        %v1610 = vunpack.c.l.b16 %v1571
        %v1611 = vunpack.c.l.b16 %v1572
        %v1612 = vunpack.c.l.b16 %v1573
        %v1613 = vpack.c.b16 %v1598, %v1597
        %v1614 = vpack.c.b16 %v1600, %v1599
        %v1615 = vpack.c.b16 %v1602, %v1601
        %v1616 = vpack.c.b16 %v1604, %v1603
        %v1617 = vpack.c.b16 %v1606, %v1605
        %v1618 = vpack.c.b16 %v1608, %v1607
        %v1619 = vpack.c.b16 %v1610, %v1609
        %v1620 = vpack.c.b16 %v1612, %v1611
        %1629 = vmatprep.subr.bf16.mxu0 0
        %1630 = vmatpush1.bf16.msra.mxu0 %v1613
        %1631 = vmatprep.subr.bf16.mxu0 0
        %1632 = vmatpush1.bf16.msra.mxu0 %v1614
        %1633 = vmatprep.subr.bf16.mxu0 0
        %1634 = vmatpush1.bf16.msra.mxu0 %v1615
        %1635 = vmatprep.subr.bf16.mxu0 0
        %1636 = vmatpush1.bf16.msra.mxu0 %v1616
        %1637 = vmatprep.subr.bf16.mxu0 0
        %1638 = vmatpush1.bf16.msra.mxu0 %v1617
        %1639 = vmatprep.subr.bf16.mxu0 0
        %1640 = vmatpush1.bf16.msra.mxu0 %v1618
        %1641 = vmatprep.subr.bf16.mxu0 0
        %1642 = vmatpush1.bf16.msra.mxu0 %v1619
        %1643 = vmatprep.subr.bf16.mxu0 0
        %1644 = vmatpush1.bf16.msra.mxu0 %v1620
        %1645 = vmatprep.subr.bf16.mxu0 0
        %1646 = vmatpush1.bf16.msra.mxu0 0
        %1647 = vmatprep.subr.bf16.mxu0 0
        %1648 = vmatpush1.bf16.msra.mxu0 0
        %1649 = vmatprep.subr.bf16.mxu0 0
        %1650 = vmatpush1.bf16.msra.mxu0 0
        %1651 = vmatprep.subr.bf16.mxu0 0
        %1652 = vmatpush1.bf16.msra.mxu0 0
        %1653 = vmatprep.subr.bf16.mxu0 0
        %1654 = vmatpush1.bf16.msra.mxu0 0
        %1655 = vmatprep.subr.bf16.mxu0 0
        %1656 = vmatpush1.bf16.msra.mxu0 0
        %1657 = vmatprep.subr.bf16.mxu0 0
        %1658 = vmatpush1.bf16.msra.mxu0 0
        %1659 = vmatprep.subr.bf16.mxu0 0
        %1660 = vmatpush1.bf16.msra.mxu0 0
        %1661 = vmatprep.mubr.bf16.mxu0 0
        %1662 = vmatmul.mubr.bf16.gmra.mrb[0].mxu0 %v1554
        %v1663 = vpop.f32.mrb[0].mxu0
        %v1664 = vadd.f32 %v1579, %v1663
        %v1665 = vpop.f32.mrb[0].mxu0
        %v1666 = vpop.f32.mrb[0].mxu0
        %v1667 = vadd.f32 %v1579, %v1666
        %v1668 = vpop.f32.mrb[0].mxu0
        %1669 = vmatprep.mubr.bf16.mxu0 0
        %1670 = vmatmul.mubr.bf16.gmra.mrb[0].mxu0 %v1555
        %v1671 = vpop.f32.mrb[0].mxu0
        %v1672 = vadd.f32 %v1579, %v1671
        %v1673 = vpop.f32.mrb[0].mxu0
        %v1674 = vpop.f32.mrb[0].mxu0
        %v1675 = vadd.f32 %v1579, %v1674
        %v1676 = vpop.f32.mrb[0].mxu0
        %1677 = vmatprep.mubr.bf16.mxu0 0
        %1678 = vmatmul.mubr.bf16.gmra.mrb[0].mxu0 %v1556
        %v1679 = vpop.f32.mrb[0].mxu0
        %v1680 = vadd.f32 %v1579, %v1679
        %v1681 = vpop.f32.mrb[0].mxu0
        %v1682 = vpop.f32.mrb[0].mxu0
        %v1683 = vadd.f32 %v1579, %v1682
        %v1684 = vpop.f32.mrb[0].mxu0
        %1685 = vmatprep.mubr.bf16.mxu0 0
        %1686 = vmatmul.mubr.bf16.gmra.mrb[0].mxu0 %v1557
        %v1687 = vpop.f32.mrb[0].mxu0
        %v1688 = vadd.f32 %v1579, %v1687
        %v1689 = vpop.f32.mrb[0].mxu0
        %v1690 = vpop.f32.mrb[0].mxu0
        %v1691 = vadd.f32 %v1579, %v1690
        %v1692 = vpop.f32.mrb[0].mxu0
        %1693 = vdwg.mxu0
        %v1694 = vunpack.c.l.bf16 %v1137
        %v1695 = vunpack.c.l.bf16 %v1138
        %v1696 = vunpack.c.l.bf16 %v1139
        %v1697 = vunpack.c.l.bf16 %v1140
        %v1698 = vunpack.c.l.bf16 %v1141
        %v1699 = vunpack.c.l.bf16 %v1142
        %v1700 = vunpack.c.l.bf16 %v1143
        %v1701 = vunpack.c.l.bf16 %v1144
        %v1702 = vadd.f32 %v1694, %v1664
        %v1703 = vadd.f32 %v1695, %v1667
        %v1704 = vadd.f32 %v1696, %v1672
        %v1705 = vadd.f32 %v1697, %v1675
        %v1706 = vadd.f32 %v1698, %v1680
        %v1707 = vadd.f32 %v1699, %v1683
        %v1708 = vadd.f32 %v1700, %v1688
        %v1709 = vadd.f32 %v1701, %v1691
        %1710 = vadd.xlane.f32.xlu0 %v1702
        %v1711 = vpop.xlane.xlu0 %1710
        %1712 = vadd.xlane.f32.xlu0 %v1703
        %v1713 = vpop.xlane.xlu0 %1712
        %1714 = vadd.xlane.f32.xlu0 %v1704
        %v1715 = vpop.xlane.xlu0 %1714
        %1716 = vadd.xlane.f32.xlu0 %v1705
        %v1717 = vpop.xlane.xlu0 %1716
        %1718 = vadd.xlane.f32.xlu0 %v1706
        %v1719 = vpop.xlane.xlu0 %1718
        %1720 = vadd.xlane.f32.xlu0 %v1707
        %v1721 = vpop.xlane.xlu0 %1720
        %1722 = vadd.xlane.f32.xlu0 %v1708
        %v1723 = vpop.xlane.xlu0 %1722
        %1724 = vadd.xlane.f32.xlu0 %v1709
        %v1725 = vpop.xlane.xlu0 %1724
        %v1726 = vrcp.pop 128.0
        %v1727 = vmul.f32 %v1711, %v1726
        %v1728 = vmul.f32 %v1713, %v1726
        %v1729 = vmul.f32 %v1715, %v1726
        %v1730 = vmul.f32 %v1717, %v1726
        %v1731 = vmul.f32 %v1719, %v1726
        %v1732 = vmul.f32 %v1721, %v1726
        %v1733 = vmul.f32 %v1723, %v1726
        %v1734 = vmul.f32 %v1725, %v1726
        %v1735 = vsub.f32 %v1702, %v1727
        %v1736 = vsub.f32 %v1703, %v1728
        %v1737 = vsub.f32 %v1704, %v1729
        %v1738 = vsub.f32 %v1705, %v1730
        %v1739 = vsub.f32 %v1706, %v1731
        %v1740 = vsub.f32 %v1707, %v1732
        %v1741 = vsub.f32 %v1708, %v1733
        %v1742 = vsub.f32 %v1709, %v1734
        %v1743 = vmul.f32 %v1735, %v1735
        %v1744 = vmul.f32 %v1736, %v1736
        %v1745 = vmul.f32 %v1737, %v1737
        %v1746 = vmul.f32 %v1738, %v1738
        %v1747 = vmul.f32 %v1739, %v1739
        %v1748 = vmul.f32 %v1740, %v1740
        %v1749 = vmul.f32 %v1741, %v1741
        %v1750 = vmul.f32 %v1742, %v1742
        %1751 = vadd.xlane.f32.xlu0 %v1743
        %v1752 = vpop.xlane.xlu0 %1751
        %1753 = vadd.xlane.f32.xlu0 %v1744
        %v1754 = vpop.xlane.xlu0 %1753
        %1755 = vadd.xlane.f32.xlu0 %v1745
        %v1756 = vpop.xlane.xlu0 %1755
        %1757 = vadd.xlane.f32.xlu0 %v1746
        %v1758 = vpop.xlane.xlu0 %1757
        %1759 = vadd.xlane.f32.xlu0 %v1747
        %v1760 = vpop.xlane.xlu0 %1759
        %1761 = vadd.xlane.f32.xlu0 %v1748
        %v1762 = vpop.xlane.xlu0 %1761
        %1763 = vadd.xlane.f32.xlu0 %v1749
        %v1764 = vpop.xlane.xlu0 %1763
        %1765 = vadd.xlane.f32.xlu0 %v1750
        %v1766 = vpop.xlane.xlu0 %1765
        %v1767 = vmul.f32 %v1752, %v1726
        %v1768 = vmul.f32 %v1754, %v1726
        %v1769 = vmul.f32 %v1756, %v1726
        %v1770 = vmul.f32 %v1758, %v1726
        %v1771 = vmul.f32 %v1760, %v1726
        %v1772 = vmul.f32 %v1762, %v1726
        %v1773 = vmul.f32 %v1764, %v1726
        %v1774 = vmul.f32 %v1766, %v1726
        %v1775 = vadd.f32 %v1767, 1e-05
        %v1776 = vadd.f32 %v1768, 1e-05
        %v1777 = vadd.f32 %v1769, 1e-05
        %v1778 = vadd.f32 %v1770, 1e-05
        %v1779 = vadd.f32 %v1771, 1e-05
        %v1780 = vadd.f32 %v1772, 1e-05
        %v1781 = vadd.f32 %v1773, 1e-05
        %v1782 = vadd.f32 %v1774, 1e-05
        %v1783 = vrsqrt.pop %v1775
        %v1784 = vrsqrt.pop %v1776
        %v1785 = vrsqrt.pop %v1777
        %v1786 = vrsqrt.pop %v1778
        %v1787 = vrsqrt.pop %v1779
        %v1788 = vrsqrt.pop %v1780
        %v1789 = vrsqrt.pop %v1781
        %v1790 = vrsqrt.pop %v1782
        %v1791 = vmul.f32 %v1735, %v1783
        %v1792 = vmul.f32 %v1736, %v1784
        %v1793 = vmul.f32 %v1737, %v1785
        %v1794 = vmul.f32 %v1738, %v1786
        %v1795 = vmul.f32 %v1739, %v1787
        %v1796 = vmul.f32 %v1740, %v1788
        %v1797 = vmul.f32 %v1741, %v1789
        %v1798 = vmul.f32 %v1742, %v1790
        %v1799 = vld [vmem:[%s10] sm:$0x1]
        %v1801 = vlaneseq
        %v1802 = vshrl.u32 %v1801, 7
        %v1803 = vsub.s32 0, %v1802
        %v1804 = vrot.slane %v1799, %v1803
        %v1806 = vmul.f32 %v1791, %v1804
        %v1807 = vmul.f32 %v1792, %v1804
        %v1808 = vmul.f32 %v1793, %v1804
        %v1809 = vmul.f32 %v1794, %v1804
        %v1810 = vmul.f32 %v1795, %v1804
        %v1811 = vmul.f32 %v1796, %v1804
        %v1812 = vmul.f32 %v1797, %v1804
        %v1813 = vmul.f32 %v1798, %v1804
        %v1814 = vld [vmem:[%s11] sm:$0x1]
        %v1816 = vlaneseq
        %v1817 = vshrl.u32 %v1816, 7
        %v1818 = vsub.s32 0, %v1817
        %v1819 = vrot.slane %v1814, %v1818
        %v1821 = vadd.f32 %v1806, %v1819
        %v1822 = vadd.f32 %v1807, %v1819
        %v1823 = vadd.f32 %v1808, %v1819
        %v1824 = vadd.f32 %v1809, %v1819
        %v1825 = vadd.f32 %v1810, %v1819
        %v1826 = vadd.f32 %v1811, %v1819
        %v1827 = vadd.f32 %v1812, %v1819
        %v1828 = vadd.f32 %v1813, %v1819
        %v1829 = vpack.c.bf16 %v1822, %v1821
        %v1830 = vpack.c.bf16 %v1824, %v1823
        %v1831 = vpack.c.bf16 %v1826, %v1825
        %v1832 = vpack.c.bf16 %v1828, %v1827
        %v1833 = vld [vmem:[%s12] sm:$0xff]
        %v1834 = vld [vmem:[%s12 + $0x8] sm:$0xff]
        %v1835 = vld [vmem:[%s12 + $0x10] sm:$0xff]
        %v1836 = vld [vmem:[%s12 + $0x18] sm:$0xff]
        %v1837 = vld [vmem:[%s12 + $0x20] sm:$0xff]
        %v1838 = vld [vmem:[%s12 + $0x28] sm:$0xff]
        %v1839 = vld [vmem:[%s12 + $0x30] sm:$0xff]
        %v1840 = vld [vmem:[%s12 + $0x38] sm:$0xff]
        %v1841 = vld [vmem:[%s12 + $0x40] sm:$0xff]
        %v1842 = vld [vmem:[%s12 + $0x48] sm:$0xff]
        %v1843 = vld [vmem:[%s12 + $0x50] sm:$0xff]
        %v1844 = vld [vmem:[%s12 + $0x58] sm:$0xff]
        %v1845 = vld [vmem:[%s12 + $0x60] sm:$0xff]
        %v1846 = vld [vmem:[%s12 + $0x68] sm:$0xff]
        %v1847 = vld [vmem:[%s12 + $0x70] sm:$0xff]
        %v1848 = vld [vmem:[%s12 + $0x78] sm:$0xff]
        %v1849 = vld [vmem:[%s13] sm:$0x3]
        %v1851 = vlaneseq
        %v1852 = vshrl.u32 %v1851, 7
        %v1853 = vsub.s32 0, %v1852
        %v1854 = vrot.slane %v1849, %v1853
        %v1855 = vlaneseq
        %v1856 = vshrl.u32 %v1855, 7
        %v1857 = vsub.s32 1, %v1856
        %v1858 = vrot.slane %v1849, %v1857
        %v1877 = vunpack.c.l.b16 %v1833
        %v1878 = vunpack.c.h.b16 %v1833
        %v1879 = vunpack.c.l.b16 %v1834
        %v1880 = vunpack.c.h.b16 %v1834
        %v1881 = vunpack.c.l.b16 %v1835
        %v1882 = vunpack.c.h.b16 %v1835
        %v1883 = vunpack.c.l.b16 %v1836
        %v1884 = vunpack.c.h.b16 %v1836
        %v1885 = vunpack.c.l.b16 %v1837
        %v1886 = vunpack.c.h.b16 %v1837
        %v1887 = vunpack.c.l.b16 %v1838
        %v1888 = vunpack.c.h.b16 %v1838
        %v1889 = vunpack.c.l.b16 %v1839
        %v1890 = vunpack.c.h.b16 %v1839
        %v1891 = vunpack.c.l.b16 %v1840
        %v1892 = vunpack.c.h.b16 %v1840
        %v1893 = vunpack.c.l.b16 %v1841
        %v1894 = vunpack.c.h.b16 %v1841
        %v1895 = vunpack.c.l.b16 %v1842
        %v1896 = vunpack.c.h.b16 %v1842
        %v1897 = vunpack.c.l.b16 %v1843
        %v1898 = vunpack.c.h.b16 %v1843
        %v1899 = vunpack.c.l.b16 %v1844
        %v1900 = vunpack.c.h.b16 %v1844
        %v1901 = vunpack.c.l.b16 %v1845
        %v1902 = vunpack.c.h.b16 %v1845
        %v1903 = vunpack.c.l.b16 %v1846
        %v1904 = vunpack.c.h.b16 %v1846
        %v1905 = vunpack.c.l.b16 %v1847
        %v1906 = vunpack.c.h.b16 %v1847
        %v1907 = vunpack.c.l.b16 %v1848
        %v1908 = vunpack.c.h.b16 %v1848
        %v1909 = vpack.c.b16 %v1879, %v1877
        %v1910 = vpack.c.b16 %v1880, %v1878
        %v1911 = vpack.c.b16 %v1883, %v1881
        %v1912 = vpack.c.b16 %v1884, %v1882
        %v1913 = vpack.c.b16 %v1887, %v1885
        %v1914 = vpack.c.b16 %v1888, %v1886
        %v1915 = vpack.c.b16 %v1891, %v1889
        %v1916 = vpack.c.b16 %v1892, %v1890
        %v1917 = vpack.c.b16 %v1895, %v1893
        %v1918 = vpack.c.b16 %v1896, %v1894
        %v1919 = vpack.c.b16 %v1899, %v1897
        %v1920 = vpack.c.b16 %v1900, %v1898
        %v1921 = vpack.c.b16 %v1903, %v1901
        %v1922 = vpack.c.b16 %v1904, %v1902
        %v1923 = vpack.c.b16 %v1907, %v1905
        %v1924 = vpack.c.b16 %v1908, %v1906
        %1941 = vmatprep.subr.bf16.mxu0 %v1910
        %1942 = vmatpush1.bf16.msra.mxu0 %v1909
        %1943 = vmatprep.subr.bf16.mxu0 %v1912
        %1944 = vmatpush1.bf16.msra.mxu0 %v1911
        %1945 = vmatprep.subr.bf16.mxu0 %v1914
        %1946 = vmatpush1.bf16.msra.mxu0 %v1913
        %1947 = vmatprep.subr.bf16.mxu0 %v1916
        %1948 = vmatpush1.bf16.msra.mxu0 %v1915
        %1949 = vmatprep.subr.bf16.mxu0 %v1918
        %1950 = vmatpush1.bf16.msra.mxu0 %v1917
        %1951 = vmatprep.subr.bf16.mxu0 %v1920
        %1952 = vmatpush1.bf16.msra.mxu0 %v1919
        %1953 = vmatprep.subr.bf16.mxu0 %v1922
        %1954 = vmatpush1.bf16.msra.mxu0 %v1921
        %1955 = vmatprep.subr.bf16.mxu0 %v1924
        %1956 = vmatpush1.bf16.msra.mxu0 %v1923
        %1957 = vmatprep.subr.bf16.mxu0 0
        %1958 = vmatpush1.bf16.msra.mxu0 0
        %1959 = vmatprep.subr.bf16.mxu0 0
        %1960 = vmatpush1.bf16.msra.mxu0 0
        %1961 = vmatprep.subr.bf16.mxu0 0
        %1962 = vmatpush1.bf16.msra.mxu0 0
        %1963 = vmatprep.subr.bf16.mxu0 0
        %1964 = vmatpush1.bf16.msra.mxu0 0
        %1965 = vmatprep.subr.bf16.mxu0 0
        %1966 = vmatpush1.bf16.msra.mxu0 0
        %1967 = vmatprep.subr.bf16.mxu0 0
        %1968 = vmatpush1.bf16.msra.mxu0 0
        %1969 = vmatprep.subr.bf16.mxu0 0
        %1970 = vmatpush1.bf16.msra.mxu0 0
        %1971 = vmatprep.subr.bf16.mxu0 0
        %1972 = vmatpush1.bf16.msra.mxu0 0
        %1973 = vmatprep.mubr.bf16.mxu0 0
        %1974 = vmatmul.mubr.bf16.gmra.mrb[0].mxu0 %v1829
        %v1975 = vpop.f32.mrb[0].mxu0
        %v1976 = vadd.f32 %v1854, %v1975
        %v1977 = vpop.f32.mrb[0].mxu0
        %v1978 = vadd.f32 %v1858, %v1977
        %v1979 = vpop.f32.mrb[0].mxu0
        %v1980 = vadd.f32 %v1854, %v1979
        %v1981 = vpop.f32.mrb[0].mxu0
        %v1982 = vadd.f32 %v1858, %v1981
        %1983 = vmatprep.mubr.bf16.mxu0 0
        %1984 = vmatmul.mubr.bf16.gmra.mrb[0].mxu0 %v1830
        %v1985 = vpop.f32.mrb[0].mxu0
        %v1986 = vadd.f32 %v1854, %v1985
        %v1987 = vpop.f32.mrb[0].mxu0
        %v1988 = vadd.f32 %v1858, %v1987
        %v1989 = vpop.f32.mrb[0].mxu0
        %v1990 = vadd.f32 %v1854, %v1989
        %v1991 = vpop.f32.mrb[0].mxu0
        %v1992 = vadd.f32 %v1858, %v1991
        %1993 = vmatprep.mubr.bf16.mxu0 0
        %1994 = vmatmul.mubr.bf16.gmra.mrb[0].mxu0 %v1831
        %v1995 = vpop.f32.mrb[0].mxu0
        %v1996 = vadd.f32 %v1854, %v1995
        %v1997 = vpop.f32.mrb[0].mxu0
        %v1998 = vadd.f32 %v1858, %v1997
        %v1999 = vpop.f32.mrb[0].mxu0
        %v2000 = vadd.f32 %v1854, %v1999
        %v2001 = vpop.f32.mrb[0].mxu0
        %v2002 = vadd.f32 %v1858, %v2001
        %2003 = vmatprep.mubr.bf16.mxu0 0
        %2004 = vmatmul.mubr.bf16.gmra.mrb[0].mxu0 %v1832
        %v2005 = vpop.f32.mrb[0].mxu0
        %v2006 = vadd.f32 %v1854, %v2005
        %v2007 = vpop.f32.mrb[0].mxu0
        %v2008 = vadd.f32 %v1858, %v2007
        %v2009 = vpop.f32.mrb[0].mxu0
        %v2010 = vadd.f32 %v1854, %v2009
        %v2011 = vpop.f32.mrb[0].mxu0
        %v2012 = vadd.f32 %v1858, %v2011
        %2013 = vdwg.mxu0
        %v2014 = vmax.f32 %v1976, 0.0
        %v2015 = vmax.f32 %v1978, 0.0
        %v2016 = vmax.f32 %v1980, 0.0
        %v2017 = vmax.f32 %v1982, 0.0
        %v2018 = vmax.f32 %v1986, 0.0
        %v2019 = vmax.f32 %v1988, 0.0
        %v2020 = vmax.f32 %v1990, 0.0
        %v2021 = vmax.f32 %v1992, 0.0
        %v2022 = vmax.f32 %v1996, 0.0
        %v2023 = vmax.f32 %v1998, 0.0
        %v2024 = vmax.f32 %v2000, 0.0
        %v2025 = vmax.f32 %v2002, 0.0
        %v2026 = vmax.f32 %v2006, 0.0
        %v2027 = vmax.f32 %v2008, 0.0
        %v2028 = vmax.f32 %v2010, 0.0
        %v2029 = vmax.f32 %v2012, 0.0
        %v2030 = vpack.c.bf16 %v2016, %v2014
        %v2031 = vpack.c.bf16 %v2017, %v2015
        %v2032 = vpack.c.bf16 %v2020, %v2018
        %v2033 = vpack.c.bf16 %v2021, %v2019
        %v2034 = vpack.c.bf16 %v2024, %v2022
        %v2035 = vpack.c.bf16 %v2025, %v2023
        %v2036 = vpack.c.bf16 %v2028, %v2026
        %v2037 = vpack.c.bf16 %v2029, %v2027
        %v2038 = vld [vmem:[%s14] sm:$0xf]
        %v2039 = vld [vmem:[%s14 + $0x4] sm:$0xf]
        %v2040 = vld [vmem:[%s14 + $0x8] sm:$0xf]
        %v2041 = vld [vmem:[%s14 + $0xc] sm:$0xf]
        %v2042 = vld [vmem:[%s14 + $0x10] sm:$0xf]
        %v2043 = vld [vmem:[%s14 + $0x14] sm:$0xf]
        %v2044 = vld [vmem:[%s14 + $0x18] sm:$0xf]
        %v2045 = vld [vmem:[%s14 + $0x1c] sm:$0xf]
        %v2046 = vld [vmem:[%s14 + $0x20] sm:$0xf]
        %v2047 = vld [vmem:[%s14 + $0x24] sm:$0xf]
        %v2048 = vld [vmem:[%s14 + $0x28] sm:$0xf]
        %v2049 = vld [vmem:[%s14 + $0x2c] sm:$0xf]
        %v2050 = vld [vmem:[%s14 + $0x30] sm:$0xf]
        %v2051 = vld [vmem:[%s14 + $0x34] sm:$0xf]
        %v2052 = vld [vmem:[%s14 + $0x38] sm:$0xf]
        %v2053 = vld [vmem:[%s14 + $0x3c] sm:$0xf]
        %v2054 = vld [vmem:[%s14 + $0x40] sm:$0xf]
        %v2055 = vld [vmem:[%s14 + $0x44] sm:$0xf]
        %v2056 = vld [vmem:[%s14 + $0x48] sm:$0xf]
        %v2057 = vld [vmem:[%s14 + $0x4c] sm:$0xf]
        %v2058 = vld [vmem:[%s14 + $0x50] sm:$0xf]
        %v2059 = vld [vmem:[%s14 + $0x54] sm:$0xf]
        %v2060 = vld [vmem:[%s14 + $0x58] sm:$0xf]
        %v2061 = vld [vmem:[%s14 + $0x5c] sm:$0xf]
        %v2062 = vld [vmem:[%s14 + $0x60] sm:$0xf]
        %v2063 = vld [vmem:[%s14 + $0x64] sm:$0xf]
        %v2064 = vld [vmem:[%s14 + $0x68] sm:$0xf]
        %v2065 = vld [vmem:[%s14 + $0x6c] sm:$0xf]
        %v2066 = vld [vmem:[%s14 + $0x70] sm:$0xf]
        %v2067 = vld [vmem:[%s14 + $0x74] sm:$0xf]
        %v2068 = vld [vmem:[%s14 + $0x78] sm:$0xf]
        %v2069 = vld [vmem:[%s14 + $0x7c] sm:$0xf]
        %v2070 = vld [vmem:[%s15] sm:$0x1]
        %v2072 = vlaneseq
        %v2073 = vshrl.u32 %v2072, 7
        %v2074 = vsub.s32 0, %v2073
        %v2075 = vrot.slane %v2070, %v2074
        %v2109 = vunpack.c.l.b16 %v2038
        %v2110 = vunpack.c.l.b16 %v2039
        %v2111 = vunpack.c.l.b16 %v2040
        %v2112 = vunpack.c.l.b16 %v2041
        %v2113 = vunpack.c.l.b16 %v2042
        %v2114 = vunpack.c.l.b16 %v2043
        %v2115 = vunpack.c.l.b16 %v2044
        %v2116 = vunpack.c.l.b16 %v2045
        %v2117 = vunpack.c.l.b16 %v2046
        %v2118 = vunpack.c.l.b16 %v2047
        %v2119 = vunpack.c.l.b16 %v2048
        %v2120 = vunpack.c.l.b16 %v2049
        %v2121 = vunpack.c.l.b16 %v2050
        %v2122 = vunpack.c.l.b16 %v2051
        %v2123 = vunpack.c.l.b16 %v2052
        %v2124 = vunpack.c.l.b16 %v2053
        %v2125 = vunpack.c.l.b16 %v2054
        %v2126 = vunpack.c.l.b16 %v2055
        %v2127 = vunpack.c.l.b16 %v2056
        %v2128 = vunpack.c.l.b16 %v2057
        %v2129 = vunpack.c.l.b16 %v2058
        %v2130 = vunpack.c.l.b16 %v2059
        %v2131 = vunpack.c.l.b16 %v2060
        %v2132 = vunpack.c.l.b16 %v2061
        %v2133 = vunpack.c.l.b16 %v2062
        %v2134 = vunpack.c.l.b16 %v2063
        %v2135 = vunpack.c.l.b16 %v2064
        %v2136 = vunpack.c.l.b16 %v2065
        %v2137 = vunpack.c.l.b16 %v2066
        %v2138 = vunpack.c.l.b16 %v2067
        %v2139 = vunpack.c.l.b16 %v2068
        %v2140 = vunpack.c.l.b16 %v2069
        %v2141 = vpack.c.b16 %v2110, %v2109
        %v2142 = vpack.c.b16 %v2112, %v2111
        %v2143 = vpack.c.b16 %v2114, %v2113
        %v2144 = vpack.c.b16 %v2116, %v2115
        %v2145 = vpack.c.b16 %v2118, %v2117
        %v2146 = vpack.c.b16 %v2120, %v2119
        %v2147 = vpack.c.b16 %v2122, %v2121
        %v2148 = vpack.c.b16 %v2124, %v2123
        %v2149 = vpack.c.b16 %v2126, %v2125
        %v2150 = vpack.c.b16 %v2128, %v2127
        %v2151 = vpack.c.b16 %v2130, %v2129
        %v2152 = vpack.c.b16 %v2132, %v2131
        %v2153 = vpack.c.b16 %v2134, %v2133
        %v2154 = vpack.c.b16 %v2136, %v2135
        %v2155 = vpack.c.b16 %v2138, %v2137
        %v2156 = vpack.c.b16 %v2140, %v2139
        %2173 = vmatprep.subr.bf16.mxu0 0
        %2174 = vmatpush1.bf16.msra.mxu0 %v2141
        %2175 = vmatprep.subr.bf16.mxu0 0
        %2176 = vmatpush1.bf16.msra.mxu0 %v2142
        %2177 = vmatprep.subr.bf16.mxu0 0
        %2178 = vmatpush1.bf16.msra.mxu0 %v2143
        %2179 = vmatprep.subr.bf16.mxu0 0
        %2180 = vmatpush1.bf16.msra.mxu0 %v2144
        %2181 = vmatprep.subr.bf16.mxu0 0
        %2182 = vmatpush1.bf16.msra.mxu0 %v2145
        %2183 = vmatprep.subr.bf16.mxu0 0
        %2184 = vmatpush1.bf16.msra.mxu0 %v2146
        %2185 = vmatprep.subr.bf16.mxu0 0
        %2186 = vmatpush1.bf16.msra.mxu0 %v2147
        %2187 = vmatprep.subr.bf16.mxu0 0
        %2188 = vmatpush1.bf16.msra.mxu0 %v2148
        %2189 = vmatprep.subr.bf16.mxu0 0
        %2190 = vmatpush1.bf16.msra.mxu0 %v2149
        %2191 = vmatprep.subr.bf16.mxu0 0
        %2192 = vmatpush1.bf16.msra.mxu0 %v2150
        %2193 = vmatprep.subr.bf16.mxu0 0
        %2194 = vmatpush1.bf16.msra.mxu0 %v2151
        %2195 = vmatprep.subr.bf16.mxu0 0
        %2196 = vmatpush1.bf16.msra.mxu0 %v2152
        %2197 = vmatprep.subr.bf16.mxu0 0
        %2198 = vmatpush1.bf16.msra.mxu0 %v2153
        %2199 = vmatprep.subr.bf16.mxu0 0
        %2200 = vmatpush1.bf16.msra.mxu0 %v2154
        %2201 = vmatprep.subr.bf16.mxu0 0
        %2202 = vmatpush1.bf16.msra.mxu0 %v2155
        %2203 = vmatprep.subr.bf16.mxu0 0
        %2204 = vmatpush1.bf16.msra.mxu0 %v2156
        %2205 = vmatprep.mubr.bf16.mxu0 %v2031
        %2206 = vmatmul.mubr.bf16.gmra.mrb[0].mxu0 %v2030
        %v2207 = vpop.f32.mrb[0].mxu0
        %v2208 = vadd.f32 %v2075, %v2207
        %v2209 = vpop.f32.mrb[0].mxu0
        %v2210 = vpop.f32.mrb[0].mxu0
        %v2211 = vadd.f32 %v2075, %v2210
        %v2212 = vpop.f32.mrb[0].mxu0
        %2213 = vmatprep.mubr.bf16.mxu0 %v2033
        %2214 = vmatmul.mubr.bf16.gmra.mrb[0].mxu0 %v2032
        %v2215 = vpop.f32.mrb[0].mxu0
        %v2216 = vadd.f32 %v2075, %v2215
        %v2217 = vpop.f32.mrb[0].mxu0
        %v2218 = vpop.f32.mrb[0].mxu0
        %v2219 = vadd.f32 %v2075, %v2218
        %v2220 = vpop.f32.mrb[0].mxu0
        %2221 = vmatprep.mubr.bf16.mxu0 %v2035
        %2222 = vmatmul.mubr.bf16.gmra.mrb[0].mxu0 %v2034
        %v2223 = vpop.f32.mrb[0].mxu0
        %v2224 = vadd.f32 %v2075, %v2223
        %v2225 = vpop.f32.mrb[0].mxu0
        %v2226 = vpop.f32.mrb[0].mxu0
        %v2227 = vadd.f32 %v2075, %v2226
        %v2228 = vpop.f32.mrb[0].mxu0
        %2229 = vmatprep.mubr.bf16.mxu0 %v2037
        %2230 = vmatmul.mubr.bf16.gmra.mrb[0].mxu0 %v2036
        %v2231 = vpop.f32.mrb[0].mxu0
        %v2232 = vadd.f32 %v2075, %v2231
        %v2233 = vpop.f32.mrb[0].mxu0
        %v2234 = vpop.f32.mrb[0].mxu0
        %v2235 = vadd.f32 %v2075, %v2234
        %v2236 = vpop.f32.mrb[0].mxu0
        %2237 = vdwg.mxu0
        %v2238 = vadd.f32 %v1821, %v2208
        %v2239 = vadd.f32 %v1822, %v2211
        %v2240 = vadd.f32 %v1823, %v2216
        %v2241 = vadd.f32 %v1824, %v2219
        %v2242 = vadd.f32 %v1825, %v2224
        %v2243 = vadd.f32 %v1826, %v2227
        %v2244 = vadd.f32 %v1827, %v2232
        %v2245 = vadd.f32 %v1828, %v2235
        %2246 = vadd.xlane.f32.xlu0 %v2238
        %v2247 = vpop.xlane.xlu0 %2246
        %2248 = vadd.xlane.f32.xlu0 %v2239
        %v2249 = vpop.xlane.xlu0 %2248
        %2250 = vadd.xlane.f32.xlu0 %v2240
        %v2251 = vpop.xlane.xlu0 %2250
        %2252 = vadd.xlane.f32.xlu0 %v2241
        %v2253 = vpop.xlane.xlu0 %2252
        %2254 = vadd.xlane.f32.xlu0 %v2242
        %v2255 = vpop.xlane.xlu0 %2254
        %2256 = vadd.xlane.f32.xlu0 %v2243
        %v2257 = vpop.xlane.xlu0 %2256
        %2258 = vadd.xlane.f32.xlu0 %v2244
        %v2259 = vpop.xlane.xlu0 %2258
        %2260 = vadd.xlane.f32.xlu0 %v2245
        %v2261 = vpop.xlane.xlu0 %2260
        %v2262 = vmul.f32 %v2247, %v1726
        %v2263 = vmul.f32 %v2249, %v1726
        %v2264 = vmul.f32 %v2251, %v1726
        %v2265 = vmul.f32 %v2253, %v1726
        %v2266 = vmul.f32 %v2255, %v1726
        %v2267 = vmul.f32 %v2257, %v1726
        %v2268 = vmul.f32 %v2259, %v1726
        %v2269 = vmul.f32 %v2261, %v1726
        %v2270 = vsub.f32 %v2238, %v2262
        %v2271 = vsub.f32 %v2239, %v2263
        %v2272 = vsub.f32 %v2240, %v2264
        %v2273 = vsub.f32 %v2241, %v2265
        %v2274 = vsub.f32 %v2242, %v2266
        %v2275 = vsub.f32 %v2243, %v2267
        %v2276 = vsub.f32 %v2244, %v2268
        %v2277 = vsub.f32 %v2245, %v2269
        %v2278 = vmul.f32 %v2270, %v2270
        %v2279 = vmul.f32 %v2271, %v2271
        %v2280 = vmul.f32 %v2272, %v2272
        %v2281 = vmul.f32 %v2273, %v2273
        %v2282 = vmul.f32 %v2274, %v2274
        %v2283 = vmul.f32 %v2275, %v2275
        %v2284 = vmul.f32 %v2276, %v2276
        %v2285 = vmul.f32 %v2277, %v2277
        %2286 = vadd.xlane.f32.xlu0 %v2278
        %v2287 = vpop.xlane.xlu0 %2286
        %2288 = vadd.xlane.f32.xlu0 %v2279
        %v2289 = vpop.xlane.xlu0 %2288
        %2290 = vadd.xlane.f32.xlu0 %v2280
        %v2291 = vpop.xlane.xlu0 %2290
        %2292 = vadd.xlane.f32.xlu0 %v2281
        %v2293 = vpop.xlane.xlu0 %2292
        %2294 = vadd.xlane.f32.xlu0 %v2282
        %v2295 = vpop.xlane.xlu0 %2294
        %2296 = vadd.xlane.f32.xlu0 %v2283
        %v2297 = vpop.xlane.xlu0 %2296
        %2298 = vadd.xlane.f32.xlu0 %v2284
        %v2299 = vpop.xlane.xlu0 %2298
        %2300 = vadd.xlane.f32.xlu0 %v2285
        %v2301 = vpop.xlane.xlu0 %2300
        %v2302 = vmul.f32 %v2287, %v1726
        %v2303 = vmul.f32 %v2289, %v1726
        %v2304 = vmul.f32 %v2291, %v1726
        %v2305 = vmul.f32 %v2293, %v1726
        %v2306 = vmul.f32 %v2295, %v1726
        %v2307 = vmul.f32 %v2297, %v1726
        %v2308 = vmul.f32 %v2299, %v1726
        %v2309 = vmul.f32 %v2301, %v1726
        %v2310 = vadd.f32 %v2302, 1e-05
        %v2311 = vadd.f32 %v2303, 1e-05
        %v2312 = vadd.f32 %v2304, 1e-05
        %v2313 = vadd.f32 %v2305, 1e-05
        %v2314 = vadd.f32 %v2306, 1e-05
        %v2315 = vadd.f32 %v2307, 1e-05
        %v2316 = vadd.f32 %v2308, 1e-05
        %v2317 = vadd.f32 %v2309, 1e-05
        %v2318 = vrsqrt.pop %v2310
        %v2319 = vrsqrt.pop %v2311
        %v2320 = vrsqrt.pop %v2312
        %v2321 = vrsqrt.pop %v2313
        %v2322 = vrsqrt.pop %v2314
        %v2323 = vrsqrt.pop %v2315
        %v2324 = vrsqrt.pop %v2316
        %v2325 = vrsqrt.pop %v2317
        %v2326 = vmul.f32 %v2270, %v2318
        %v2327 = vmul.f32 %v2271, %v2319
        %v2328 = vmul.f32 %v2272, %v2320
        %v2329 = vmul.f32 %v2273, %v2321
        %v2330 = vmul.f32 %v2274, %v2322
        %v2331 = vmul.f32 %v2275, %v2323
        %v2332 = vmul.f32 %v2276, %v2324
        %v2333 = vmul.f32 %v2277, %v2325
        %v2334 = vld [vmem:[%s16] sm:$0x1]
        %v2336 = vlaneseq
        %v2337 = vshrl.u32 %v2336, 7
        %v2338 = vsub.s32 0, %v2337
        %v2339 = vrot.slane %v2334, %v2338
        %v2341 = vmul.f32 %v2326, %v2339
        %v2342 = vmul.f32 %v2327, %v2339
        %v2343 = vmul.f32 %v2328, %v2339
        %v2344 = vmul.f32 %v2329, %v2339
        %v2345 = vmul.f32 %v2330, %v2339
        %v2346 = vmul.f32 %v2331, %v2339
        %v2347 = vmul.f32 %v2332, %v2339
        %v2348 = vmul.f32 %v2333, %v2339
        %v2349 = vld [vmem:[%s17] sm:$0x1]
        %v2351 = vlaneseq
        %v2352 = vshrl.u32 %v2351, 7
        %v2353 = vsub.s32 0, %v2352
        %v2354 = vrot.slane %v2349, %v2353
        %v2356 = vadd.f32 %v2341, %v2354
        %v2357 = vadd.f32 %v2342, %v2354
        %v2358 = vadd.f32 %v2343, %v2354
        %v2359 = vadd.f32 %v2344, %v2354
        %v2360 = vadd.f32 %v2345, %v2354
        %v2361 = vadd.f32 %v2346, %v2354
        %v2362 = vadd.f32 %v2347, %v2354
        %v2363 = vadd.f32 %v2348, %v2354
        %2364 = vst [vmem:[%s675] sm:$0xff] %v2356
        %2365 = vst [vmem:[%s675 + $0x8] sm:$0xff] %v2357
        %2366 = vst [vmem:[%s675 + $0x10] sm:$0xff] %v2358
        %2367 = vst [vmem:[%s675 + $0x18] sm:$0xff] %v2359
        %2368 = vst [vmem:[%s675 + $0x20] sm:$0xff] %v2360
        %2369 = vst [vmem:[%s675 + $0x28] sm:$0xff] %v2361
        %2370 = vst [vmem:[%s675 + $0x30] sm:$0xff] %v2362
        %2371 = vst [vmem:[%s675 + $0x38] sm:$0xff] %v2363
        // Predicated region
        $region105: #{multitask_forward.1} parent=99 // pred_check
          %p2372 = pneg %p696
        $region106: #{multitask_forward.1} parent=99 // pred_check_branch
          %2374 = sbr.rel (%p2372) target = $region108
        $region107: #{multitask_forward.1} parent=99 // pred_region
          %v2375 = vpack.c.bf16 %v2356, %v2356
          %v2376 = vld [vmem:[%s18] sm:$0xf]
          %v2377 = vld [vmem:[%s18 + $0x4] sm:$0xf]
          %v2378 = vld [vmem:[%s18 + $0x8] sm:$0xf]
          %v2379 = vld [vmem:[%s18 + $0xc] sm:$0xf]
          %v2380 = vld [vmem:[%s18 + $0x10] sm:$0xf]
          %v2381 = vld [vmem:[%s18 + $0x14] sm:$0xf]
          %v2382 = vld [vmem:[%s18 + $0x18] sm:$0xf]
          %v2383 = vld [vmem:[%s18 + $0x1c] sm:$0xf]
          %v2384 = vld [vmem:[%s18 + $0x20] sm:$0xf]
          %v2385 = vld [vmem:[%s18 + $0x24] sm:$0xf]
          %v2386 = vld [vmem:[%s18 + $0x28] sm:$0xf]
          %v2387 = vld [vmem:[%s18 + $0x2c] sm:$0xf]
          %v2388 = vld [vmem:[%s18 + $0x30] sm:$0xf]
          %v2389 = vld [vmem:[%s18 + $0x34] sm:$0xf]
          %v2390 = vld [vmem:[%s18 + $0x38] sm:$0xf]
          %v2391 = vld [vmem:[%s18 + $0x3c] sm:$0xf]
          %v2392 = vld [vmem:[%s19] sm:$0x1]
          %v2394 = vlaneseq
          %v2395 = vshrl.u32 %v2394, 7
          %v2396 = vsub.s32 0, %v2395
          %v2397 = vrot.slane %v2392, %v2396
          %v2415 = vunpack.c.l.b16 %v2376
          %v2416 = vunpack.c.l.b16 %v2377
          %v2417 = vunpack.c.l.b16 %v2378
          %v2418 = vunpack.c.l.b16 %v2379
          %v2419 = vunpack.c.l.b16 %v2380
          %v2420 = vunpack.c.l.b16 %v2381
          %v2421 = vunpack.c.l.b16 %v2382
          %v2422 = vunpack.c.l.b16 %v2383
          %v2423 = vunpack.c.l.b16 %v2384
          %v2424 = vunpack.c.l.b16 %v2385
          %v2425 = vunpack.c.l.b16 %v2386
          %v2426 = vunpack.c.l.b16 %v2387
          %v2427 = vunpack.c.l.b16 %v2388
          %v2428 = vunpack.c.l.b16 %v2389
          %v2429 = vunpack.c.l.b16 %v2390
          %v2430 = vunpack.c.l.b16 %v2391
          %v2431 = vpack.c.b16 %v2416, %v2415
          %v2432 = vpack.c.b16 %v2418, %v2417
          %v2433 = vpack.c.b16 %v2420, %v2419
          %v2434 = vpack.c.b16 %v2422, %v2421
          %v2435 = vpack.c.b16 %v2424, %v2423
          %v2436 = vpack.c.b16 %v2426, %v2425
          %v2437 = vpack.c.b16 %v2428, %v2427
          %v2438 = vpack.c.b16 %v2430, %v2429
          %2447 = vmatprep.subr.bf16.mxu0 0
          %2448 = vmatpush1.bf16.msra.mxu0 %v2431
          %2449 = vmatprep.subr.bf16.mxu0 0
          %2450 = vmatpush1.bf16.msra.mxu0 %v2432
          %2451 = vmatprep.subr.bf16.mxu0 0
          %2452 = vmatpush1.bf16.msra.mxu0 %v2433
          %2453 = vmatprep.subr.bf16.mxu0 0
          %2454 = vmatpush1.bf16.msra.mxu0 %v2434
          %2455 = vmatprep.subr.bf16.mxu0 0
          %2456 = vmatpush1.bf16.msra.mxu0 %v2435
          %2457 = vmatprep.subr.bf16.mxu0 0
          %2458 = vmatpush1.bf16.msra.mxu0 %v2436
          %2459 = vmatprep.subr.bf16.mxu0 0
          %2460 = vmatpush1.bf16.msra.mxu0 %v2437
          %2461 = vmatprep.subr.bf16.mxu0 0
          %2462 = vmatpush1.bf16.msra.mxu0 %v2438
          %2463 = vmatprep.subr.bf16.mxu0 0
          %2464 = vmatpush1.bf16.msra.mxu0 0
          %2465 = vmatprep.subr.bf16.mxu0 0
          %2466 = vmatpush1.bf16.msra.mxu0 0
          %2467 = vmatprep.subr.bf16.mxu0 0
          %2468 = vmatpush1.bf16.msra.mxu0 0
          %2469 = vmatprep.subr.bf16.mxu0 0
          %2470 = vmatpush1.bf16.msra.mxu0 0
          %2471 = vmatprep.subr.bf16.mxu0 0
          %2472 = vmatpush1.bf16.msra.mxu0 0
          %2473 = vmatprep.subr.bf16.mxu0 0
          %2474 = vmatpush1.bf16.msra.mxu0 0
          %2475 = vmatprep.subr.bf16.mxu0 0
          %2476 = vmatpush1.bf16.msra.mxu0 0
          %2477 = vmatprep.subr.bf16.mxu0 0
          %2478 = vmatpush1.bf16.msra.mxu0 0
          %2479 = vmatprep.mubr.bf16.mxu0 0
          %2480 = vmatmul.mubr.bf16.gmra.mrb[0].mxu0 %v2375
          %v2481 = vpop.f32.mrb[0].mxu0
          %v2482 = vadd.f32 %v2397, %v2481
          %v2483 = vpop.f32.mrb[0].mxu0
          %v2484 = vpop.f32.mrb[0].mxu0
          %v2485 = vpop.f32.mrb[0].mxu0
          %2486 = vdwg.mxu0
          %2487 = vst [vmem:[%s694] sm:$0xff] %v2482
        $region108: #{multitask_forward.1} parent=99 // pred_fallthru
          _
        %s2488 = sand.u32 %s488, 1
        %s2489 = scalar_lea.sflag [#allocation5], %s2488
        %s2490 = sand.u32 %s488, 1
        %s2491 = smul.addr %s2490, 64
        %s2492 = scalar_lea.vmem [#allocation4], %s2491
        %p2493 = scmp.lt.s32.totalorder %s40, 1
        %s2494 = scalar_select %p2493, %s40, 1
        %s2495 = smul.addr %s2494, 8
        %s2496 = scalar_lea.vmem %s21, %s2495
        // Predicated region
        $region109: #{multitask_forward.1} parent=99 // pred_check
          %p2497 = pneg %p498
        $region110: #{multitask_forward.1} parent=99 // pred_check_branch
          %2499 = sbr.rel (%p2497) target = $region112
        $region111: #{multitask_forward.1} parent=99 // pred_region
          %s2500 = smul.u32 8, %s41
          %s2502 = ssub.s32 1024, 1024
          %2503 = vsyncadd %s2489, %s2502
          %s2504 = smul.addr %s40, 16
          %s2505 = sadd.s32 %s2500, %s2504
          %s2506 = smul.addr %s2505, 128
          %s2507 = scalar_lea.hbm %s20, %s2506
          %s2508 = sshll.u32 %s2492, 4
          %s2509 = int_to_ptr.vmem [resolvable:$true] %s2508
          %2514 = dma.vmem_to_hbm [thread:$0]  %s2509, 1024, %s2507, %s2489, 128, 128, 8
        $region112: #{multitask_forward.1} parent=99 // pred_fallthru
          _
        // Predicated region
        $region113: #{multitask_forward.1} parent=99 // pred_check
          %p2515 = pneg %p524
        $region114: #{multitask_forward.1} parent=99 // pred_check_branch
          %2517 = sbr.rel (%p2515) target = $region116
        $region115: #{multitask_forward.1} parent=99 // pred_region
          _
        $region116: #{multitask_forward.1} parent=99 // pred_fallthru
          _
      $region100: #{multitask_forward.1} parent=5 // pred_fallthru
        _
      %p2518 = scmp.le.s32.totalorder 2, %s31
      // Predicated region
      $region117: #{multitask_forward.1} parent=5 // pred_check
        %p2519 = pneg %p2518
      $region118: #{multitask_forward.1} parent=5 // pred_check_branch
        %2521 = sbr.rel (%p2519) target = $region120
      $region119: #{multitask_forward.1} parent=5 // pred_region
        %s2522 = ssub.s32 %s31, 2
        // Predicated region
        $region121: #{multitask_forward.1} parent=119 // pred_check
          %p2523 = pneg %p504
        $region122: #{multitask_forward.1} parent=119 // pred_check_branch
          %2525 = sbr.rel (%p2523) target = $region124
        $region123: #{multitask_forward.1} parent=119 // pred_region
          %s2526 = sand.u32 %s489, 1
          %s2527 = scalar_lea.sflag [#allocation5], %s2526
          %s2528 = sand.u32 %s489, 1
          %s2529 = smul.addr %s2528, 64
          %s2530 = scalar_lea.vmem [#allocation4], %s2529
          %2531 = dma.done %s2527, 1024
        $region124: #{multitask_forward.1} parent=119 // pred_fallthru
          _
        // Predicated region
        $region125: #{multitask_forward.1} parent=119 // pred_check
          %p2532 = pneg %p530
        $region126: #{multitask_forward.1} parent=119 // pred_check_branch
          %2534 = sbr.rel (%p2532) target = $region128
        $region127: #{multitask_forward.1} parent=119 // pred_region
          %p2535 = scmp.lt.s32.totalorder %s42, 1
          %s2536 = scalar_select %p2535, %s42, 1
          %s2537 = smul.addr %s2536, 8
          %s2538 = scalar_lea.vmem %s21, %s2537
        $region128: #{multitask_forward.1} parent=119 // pred_fallthru
          _
      $region120: #{multitask_forward.1} parent=5 // pred_fallthru
        _
    $region6: #{multitask_forward.1} parent=1 // loop_footer
      %s35 = sadd.s32 1, %s31
    $region7: #{multitask_forward.1} parent=1 // loop_footer_branch
      %30 = sbr.rel target = $region3
    $region8: #{multitask_forward.1} parent=1 // loop_exit
      _
    %2539 = vsyncpa [#allocation5], 1
    %s2540 = scalar_lea.sflag [#allocation5], 1
    %2541 = vsyncpa %s2540, 1

</llo_original>
